<compile_context>
chip_gen: v7x
topology: tpu7x:2x2x1
jax: 0.10.0
libtpu: 0.0.40
codegen_flags: <defaults>
</compile_context>

<pallas_src>
import jax
import jax.numpy as jnp
from jax import lax
from jax.experimental import pallas as pl
from jax.experimental.pallas import tpu as pltpu

F_IN = 14          # true feature width of FcNet
F_PAD = 16         # features padded to 16 sublanes (2 sublane tiles of 8)
N_LAYERS = 6
BN_EPS = 1e-5


def fcnet_kernel(x_ref, w_ref, g_ref, b_ref, wo_ref, bo_ref, o_ref):
    """x_ref:  (F_PAD, N)         transposed activations, rows 14..15 zero
       w_ref:  (6, F_PAD, F_PAD)  padded hidden weights W (y_T = W @ x_T), f32
       g_ref:  (6, F_PAD, 1)      BN gamma (padded rows = 0), f32
       b_ref:  (6, F_PAD, 1)      BN beta  (padded rows = 0), f32
       wo_ref: (F_PAD, F_PAD)     padded output weight, f32
       bo_ref: (F_PAD, 1)         output bias (padded rows = 0), f32
       o_ref:  (F_PAD, N)         f32 output (written once, after fc_out)
    """
    # True row count: the wrapper does NOT lane-pad N, so shape[1] == n and no
    # column masking is needed for the batch statistics.
    inv_n = 1.0 / x_ref.shape[1]
    act_dtype = x_ref.dtype

    h = x_ref[...]                                     # (F_PAD, N), act_dtype
    for layer in range(N_LAYERS):
        w = w_ref[layer]                               # (16, 16) f32

        # --- sufficient statistics of the layer INPUT (no y intermediate) ---
        s1 = jnp.sum(h.astype(jnp.float32), axis=-1, keepdims=True)   # (16,1)
        gram = lax.dot_general(h, h, (((1,), (1,)), ((), ())),
                               preferred_element_type=jnp.float32)    # (16,16)

        mean_h = s1 * inv_n                                            # (16,1)
        mean_y = jnp.dot(w, mean_h, preferred_element_type=jnp.float32)
        # E[y^2] per feature = diag(W (G/N) W^T) = rowsum((W @ (G/N)) * W)
        wg = jnp.dot(w, gram, preferred_element_type=jnp.float32) * inv_n
        ey2 = jnp.sum(wg * w, axis=-1, keepdims=True)                  # (16,1)
        var = jnp.maximum(ey2 - mean_y * mean_y, 0.0)   # biased var, clamped

        scale = g_ref[layer] * lax.rsqrt(var + BN_EPS)                 # (16,1)
        shift = b_ref[layer] - mean_y * scale                          # (16,1)

        # --- fold BN scale into the weight; one fused matmul+shift+ReLU ---
        w_eff = (scale * w).astype(act_dtype)                          # (16,16)
        h = jnp.maximum(
            jnp.dot(w_eff, h, preferred_element_type=jnp.float32) + shift,
            0.0).astype(act_dtype)

    # fc_out: Linear with bias (transposed: Wo @ h + bo), single output store.
    o_ref[...] = jnp.dot(wo_ref[...].astype(act_dtype), h,
                         preferred_element_type=jnp.float32) + bo_ref[...]


def _pad_weight(w):
    """(14,14) PyTorch-style (out,in) weight -> padded (16,16) W (not W.T,
    because the kernel computes y_T = W @ x_T)."""
    return jnp.zeros((F_PAD, F_PAD), jnp.float32).at[:F_IN, :F_IN].set(
        jnp.asarray(w, jnp.float32))


def _vmem_cap_bytes():
    """Generation-aware VMEM budget for the gridless kernel."""
    try:
        phys = int(pltpu.get_tpu_info().vmem_capacity_bytes)
    except Exception:
        phys = 64 * 1024 * 1024          # conservative fallback (v7x per-TC)
    if phys <= 64 * 1024 * 1024:         # v7x: leave >50% headroom
        return int(phys * 0.45)
    return min(96 * 1024 * 1024, int(phys * 0.75))   # v5e/v6e (128 MiB parts)


def fcnet_forward(x, hidden_weights, gammas, betas, w_out, b_out,
                  act_dtype=jnp.float32):
    """x: (images, patches, 14).  Returns (images, patches, 14) float32.

    act_dtype=jnp.bfloat16 halves activation residency/traffic (recommended on
    v6e/v7x); all BN statistics and matmul accumulation remain float32."""
    images, patches, f = x.shape
    assert f == F_IN
    n = images * patches

    # TODO(synk): the (N,14)->(16,N) transpose here and the inverse transpose
    # on the way out are wrapper-side HBM relayouts; in the full LIDIA
    # pipeline keep the (F, N) layout across adjacent ops instead.
    x_t = jnp.zeros((F_PAD, n), act_dtype).at[:F_IN, :].set(
        x.reshape(n, F_IN).astype(act_dtype).T)

    w_stack = jnp.stack([_pad_weight(w) for w in hidden_weights])   # (6,16,16)
    g_pad = jnp.zeros((N_LAYERS, F_PAD, 1), jnp.float32).at[:, :F_IN, 0].set(gammas)
    b_pad = jnp.zeros((N_LAYERS, F_PAD, 1), jnp.float32).at[:, :F_IN, 0].set(betas)
    wo_pad = _pad_weight(w_out)                                     # (16,16)
    bo_pad = jnp.zeros((F_PAD, 1), jnp.float32).at[:F_IN, 0].set(b_out)

    # Resident full-width buffers: x_t (act), h (act), matmul temp (f32),
    # output (f32); everything else is (16,16)-sized.
    act_bytes = jnp.dtype(act_dtype).itemsize
    working = F_PAD * n * (2 * act_bytes + 2 * 4)
    vmem_cap = _vmem_cap_bytes()
    if 2 * working > vmem_cap:
        # TODO(synk): tiled/streaming path over N (stats pass + apply pass per
        # layer with double-buffered DMA) instead of refusing to run.
        raise ValueError(
            f"FcNet gridless kernel: N={n} working set ({working} B) exceeds "
            f"the VMEM budget ({vmem_cap} B); tiled path not implemented.")
    vmem_bytes = int(min(vmem_cap, max(16 * 1024 * 1024, 2 * working)))

    vmem = pl.BlockSpec(memory_space=pltpu.MemorySpace.VMEM)
    out_t = pl.pallas_call(
        fcnet_kernel,
        out_shape=jax.ShapeDtypeStruct((F_PAD, n), jnp.float32),
        in_specs=[vmem] * 6,
        out_specs=vmem,
        compiler_params=pltpu.CompilerParams(vmem_limit_bytes=vmem_bytes),
    )(x_t, w_stack, g_pad, b_pad, wo_pad, bo_pad)

    return out_t[:F_IN, :].T.reshape(images, patches, F_IN)


def fcnet_reference(x, hidden_weights, gammas, betas, w_out, b_out):
    """Pure-JAX reference matching the PyTorch forward (training-mode BN)."""
    images, patches, f = x.shape
    h = x.reshape(images * patches, f)
    for l in range(N_LAYERS):
        h = h @ hidden_weights[l].T
        mean = h.mean(axis=0)
        var = ((h - mean) ** 2).mean(axis=0)
        h = (h - mean) / jnp.sqrt(var + BN_EPS) * gammas[l] + betas[l]
        h = jnp.maximum(h, 0.0)
    h = h @ w_out.T + b_out
    return h.reshape(images, patches, f)


if __name__ == "__main__":
    key = jax.random.PRNGKey(0)
    keys = jax.random.split(key, 9)

    # Deterministic parameter init (shapes from FcNet.__init__).
    bound = 1.0 / (F_IN ** 0.5)
    hidden_weights = [
        jax.random.uniform(keys[l], (F_IN, F_IN), jnp.float32, -bound, bound)
        for l in range(N_LAYERS)
    ]
    gammas = jnp.ones((N_LAYERS, F_IN), jnp.float32)   # BN default init
    betas = jnp.zeros((N_LAYERS, F_IN), jnp.float32)
    w_out = jax.random.uniform(keys[6], (F_IN, F_IN), jnp.float32, -bound, bound)
    b_out = jax.random.uniform(keys[7], (F_IN,), jnp.float32, -bound, bound)

    # Small input: 2 images, 8 patches, 14 values per patch.
    x = jax.random.normal(keys[8], (2, 8, F_IN), jnp.float32)

    y_ref = fcnet_reference(x, hidden_weights, gammas, betas, w_out, b_out)

    # f32 activation path: strict check against the reference.
    y = fcnet_forward(x, hidden_weights, gammas, betas, w_out, b_out)
    y = jax.block_until_ready(y)
    assert y.shape == (2, 8, F_IN)
    assert jnp.allclose(y, y_ref, atol=1e-4, rtol=1e-4), "f32 mismatch vs ref"

    # bf16 activation path (v6e/v7x fast path): loose check (bf16 rounding of
    # the activations; stats/accumulation stay f32).
    y_bf16 = fcnet_forward(x, hidden_weights, gammas, betas, w_out, b_out,
                           act_dtype=jnp.bfloat16)
    y_bf16 = jax.block_until_ready(y_bf16)
    assert bool(jnp.all(jnp.isfinite(y_bf16)))
    assert jnp.allclose(y_bf16, y_ref, atol=1e-1, rtol=1e-1), "bf16 mismatch"

    print("KERNEL_OK")
</pallas_src>

<mosaic_0001>
module attributes {stable_mosaic.version = 11 : i64} {
  func.func @fcnet_kernel(%arg0: memref<16x16xf32, #tpu.memory_space<vmem>>, %arg1: memref<6x16x16xf32, #tpu.memory_space<vmem>>, %arg2: memref<6x16x1xf32, #tpu.memory_space<vmem>>, %arg3: memref<6x16x1xf32, #tpu.memory_space<vmem>>, %arg4: memref<16x16xf32, #tpu.memory_space<vmem>>, %arg5: memref<16x1xf32, #tpu.memory_space<vmem>>, %arg6: memref<16x16xf32, #tpu.memory_space<vmem>>) attributes {dimension_semantics = [], scalar_prefetch = 0 : i64, scratch_operands = 0 : i64, tpu.core_type = #tpu.core_type<tc>} {
    %c0 = arith.constant 0 : index
    %c0_0 = arith.constant 0 : index
    %0 = vector.load %arg0[%c0, %c0_0] : memref<16x16xf32, #tpu.memory_space<vmem>>, vector<16x16xf32>
    %c0_1 = arith.constant 0 : index
    %c0_2 = arith.constant 0 : index
    %c0_3 = arith.constant 0 : index
    %1 = vector.load %arg1[%c0_1, %c0_2, %c0_3] : memref<6x16x16xf32, #tpu.memory_space<vmem>>, vector<1x16x16xf32>
    %2 = vector.shape_cast %1 : vector<1x16x16xf32> to vector<16x16xf32>
    %cst = arith.constant dense<0.000000e+00> : vector<16xf32>
    %3 = vector.multi_reduction <add>, %0, %cst [1] : vector<16x16xf32> to vector<16xf32>
    %4 = vector.shape_cast %3 : vector<16xf32> to vector<16x1xf32>
    %cst_4 = arith.constant dense<0.000000e+00> : vector<16x16xf32>
    %5 = tpu.matmul %0, %0, %cst_4 {dimension_numbers = #tpu.dot_dimension_numbers<[1], [1], [0], [0], [0, 0, 1, 0], [], []>} : vector<16x16xf32>, vector<16x16xf32>, vector<16x16xf32> -> vector<16x16xf32>
    %cst_5 = arith.constant 6.250000e-02 : f32
    %6 = vector.broadcast %cst_5 : f32 to vector<16x1xf32>
    %7 = arith.mulf %4, %6 : vector<16x1xf32>
    %cst_6 = arith.constant dense<0.000000e+00> : vector<16x1xf32>
    %8 = tpu.matmul %2, %7, %cst_6 {dimension_numbers = #tpu.dot_dimension_numbers<[1], [0], [0], [1], [0, 0, 1, 1], [], []>} : vector<16x16xf32>, vector<16x1xf32>, vector<16x1xf32> -> vector<16x1xf32>
    %cst_7 = arith.constant dense<0.000000e+00> : vector<16x16xf32>
    %9 = tpu.matmul %2, %5, %cst_7 {dimension_numbers = #tpu.dot_dimension_numbers<[1], [0], [0], [1], [0, 0, 1, 1], [], []>} : vector<16x16xf32>, vector<16x16xf32>, vector<16x16xf32> -> vector<16x16xf32>
    %cst_8 = arith.constant 6.250000e-02 : f32
    %10 = vector.broadcast %cst_8 : f32 to vector<16x16xf32>
    %11 = arith.mulf %9, %10 : vector<16x16xf32>
    %12 = arith.mulf %11, %2 : vector<16x16xf32>
    %cst_9 = arith.constant dense<0.000000e+00> : vector<16xf32>
    %13 = vector.multi_reduction <add>, %12, %cst_9 [1] : vector<16x16xf32> to vector<16xf32>
    %14 = vector.shape_cast %13 : vector<16xf32> to vector<16x1xf32>
    %15 = arith.mulf %8, %8 : vector<16x1xf32>
    %16 = arith.subf %14, %15 : vector<16x1xf32>
    %cst_10 = arith.constant 0.000000e+00 : f32
    %17 = vector.broadcast %cst_10 : f32 to vector<16x1xf32>
    %18 = arith.maximumf %16, %17 : vector<16x1xf32>
    %c0_11 = arith.constant 0 : index
    %c0_12 = arith.constant 0 : index
    %c0_13 = arith.constant 0 : index
    %19 = vector.load %arg2[%c0_11, %c0_12, %c0_13] : memref<6x16x1xf32, #tpu.memory_space<vmem>>, vector<1x16x1xf32>
    %20 = vector.shape_cast %19 : vector<1x16x1xf32> to vector<16x1xf32>
    %cst_14 = arith.constant 9.99999974E-6 : f32
    %21 = vector.broadcast %cst_14 : f32 to vector<16x1xf32>
    %22 = arith.addf %18, %21 : vector<16x1xf32>
    %23 = math.rsqrt %22 : vector<16x1xf32>
    %24 = arith.mulf %20, %23 : vector<16x1xf32>
    %c0_15 = arith.constant 0 : index
    %c0_16 = arith.constant 0 : index
    %c0_17 = arith.constant 0 : index
    %25 = vector.load %arg3[%c0_15, %c0_16, %c0_17] : memref<6x16x1xf32, #tpu.memory_space<vmem>>, vector<1x16x1xf32>
    %26 = vector.shape_cast %25 : vector<1x16x1xf32> to vector<16x1xf32>
    %27 = arith.mulf %8, %24 : vector<16x1xf32>
    %28 = arith.subf %26, %27 : vector<16x1xf32>
    %29 = vector.broadcast %24 : vector<16x1xf32> to vector<16x16xf32>
    %30 = arith.mulf %29, %2 : vector<16x16xf32>
    %cst_18 = arith.constant dense<0.000000e+00> : vector<16x16xf32>
    %31 = tpu.matmul %30, %0, %cst_18 {dimension_numbers = #tpu.dot_dimension_numbers<[1], [0], [0], [1], [0, 0, 1, 1], [], []>} : vector<16x16xf32>, vector<16x16xf32>, vector<16x16xf32> -> vector<16x16xf32>
    %32 = vector.broadcast %28 : vector<16x1xf32> to vector<16x16xf32>
    %33 = arith.addf %31, %32 : vector<16x16xf32>
    %cst_19 = arith.constant 0.000000e+00 : f32
    %34 = vector.broadcast %cst_19 : f32 to vector<16x16xf32>
    %35 = arith.maximumf %33, %34 : vector<16x16xf32>
    %c1 = arith.constant 1 : index
    %c0_20 = arith.constant 0 : index
    %c0_21 = arith.constant 0 : index
    %36 = vector.load %arg1[%c1, %c0_20, %c0_21] : memref<6x16x16xf32, #tpu.memory_space<vmem>>, vector<1x16x16xf32>
    %37 = vector.shape_cast %36 : vector<1x16x16xf32> to vector<16x16xf32>
    %cst_22 = arith.constant dense<0.000000e+00> : vector<16xf32>
    %38 = vector.multi_reduction <add>, %35, %cst_22 [1] : vector<16x16xf32> to vector<16xf32>
    %39 = vector.shape_cast %38 : vector<16xf32> to vector<16x1xf32>
    %cst_23 = arith.constant dense<0.000000e+00> : vector<16x16xf32>
    %40 = tpu.matmul %35, %35, %cst_23 {dimension_numbers = #tpu.dot_dimension_numbers<[1], [1], [0], [0], [0, 0, 1, 0], [], []>} : vector<16x16xf32>, vector<16x16xf32>, vector<16x16xf32> -> vector<16x16xf32>
    %cst_24 = arith.constant 6.250000e-02 : f32
    %41 = vector.broadcast %cst_24 : f32 to vector<16x1xf32>
    %42 = arith.mulf %39, %41 : vector<16x1xf32>
    %cst_25 = arith.constant dense<0.000000e+00> : vector<16x1xf32>
    %43 = tpu.matmul %37, %42, %cst_25 {dimension_numbers = #tpu.dot_dimension_numbers<[1], [0], [0], [1], [0, 0, 1, 1], [], []>} : vector<16x16xf32>, vector<16x1xf32>, vector<16x1xf32> -> vector<16x1xf32>
    %cst_26 = arith.constant dense<0.000000e+00> : vector<16x16xf32>
    %44 = tpu.matmul %37, %40, %cst_26 {dimension_numbers = #tpu.dot_dimension_numbers<[1], [0], [0], [1], [0, 0, 1, 1], [], []>} : vector<16x16xf32>, vector<16x16xf32>, vector<16x16xf32> -> vector<16x16xf32>
    %cst_27 = arith.constant 6.250000e-02 : f32
    %45 = vector.broadcast %cst_27 : f32 to vector<16x16xf32>
    %46 = arith.mulf %44, %45 : vector<16x16xf32>
    %47 = arith.mulf %46, %37 : vector<16x16xf32>
    %cst_28 = arith.constant dense<0.000000e+00> : vector<16xf32>
    %48 = vector.multi_reduction <add>, %47, %cst_28 [1] : vector<16x16xf32> to vector<16xf32>
    %49 = vector.shape_cast %48 : vector<16xf32> to vector<16x1xf32>
    %50 = arith.mulf %43, %43 : vector<16x1xf32>
    %51 = arith.subf %49, %50 : vector<16x1xf32>
    %cst_29 = arith.constant 0.000000e+00 : f32
    %52 = vector.broadcast %cst_29 : f32 to vector<16x1xf32>
    %53 = arith.maximumf %51, %52 : vector<16x1xf32>
    %c1_30 = arith.constant 1 : index
    %c0_31 = arith.constant 0 : index
    %c0_32 = arith.constant 0 : index
    %54 = vector.load %arg2[%c1_30, %c0_31, %c0_32] : memref<6x16x1xf32, #tpu.memory_space<vmem>>, vector<1x16x1xf32>
    %55 = vector.shape_cast %54 : vector<1x16x1xf32> to vector<16x1xf32>
    %cst_33 = arith.constant 9.99999974E-6 : f32
    %56 = vector.broadcast %cst_33 : f32 to vector<16x1xf32>
    %57 = arith.addf %53, %56 : vector<16x1xf32>
    %58 = math.rsqrt %57 : vector<16x1xf32>
    %59 = arith.mulf %55, %58 : vector<16x1xf32>
    %c1_34 = arith.constant 1 : index
    %c0_35 = arith.constant 0 : index
    %c0_36 = arith.constant 0 : index
    %60 = vector.load %arg3[%c1_34, %c0_35, %c0_36] : memref<6x16x1xf32, #tpu.memory_space<vmem>>, vector<1x16x1xf32>
    %61 = vector.shape_cast %60 : vector<1x16x1xf32> to vector<16x1xf32>
    %62 = arith.mulf %43, %59 : vector<16x1xf32>
    %63 = arith.subf %61, %62 : vector<16x1xf32>
    %64 = vector.broadcast %59 : vector<16x1xf32> to vector<16x16xf32>
    %65 = arith.mulf %64, %37 : vector<16x16xf32>
    %cst_37 = arith.constant dense<0.000000e+00> : vector<16x16xf32>
    %66 = tpu.matmul %65, %35, %cst_37 {dimension_numbers = #tpu.dot_dimension_numbers<[1], [0], [0], [1], [0, 0, 1, 1], [], []>} : vector<16x16xf32>, vector<16x16xf32>, vector<16x16xf32> -> vector<16x16xf32>
    %67 = vector.broadcast %63 : vector<16x1xf32> to vector<16x16xf32>
    %68 = arith.addf %66, %67 : vector<16x16xf32>
    %cst_38 = arith.constant 0.000000e+00 : f32
    %69 = vector.broadcast %cst_38 : f32 to vector<16x16xf32>
    %70 = arith.maximumf %68, %69 : vector<16x16xf32>
    %c2 = arith.constant 2 : index
    %c0_39 = arith.constant 0 : index
    %c0_40 = arith.constant 0 : index
    %71 = vector.load %arg1[%c2, %c0_39, %c0_40] : memref<6x16x16xf32, #tpu.memory_space<vmem>>, vector<1x16x16xf32>
    %72 = vector.shape_cast %71 : vector<1x16x16xf32> to vector<16x16xf32>
    %cst_41 = arith.constant dense<0.000000e+00> : vector<16xf32>
    %73 = vector.multi_reduction <add>, %70, %cst_41 [1] : vector<16x16xf32> to vector<16xf32>
    %74 = vector.shape_cast %73 : vector<16xf32> to vector<16x1xf32>
    %cst_42 = arith.constant dense<0.000000e+00> : vector<16x16xf32>
    %75 = tpu.matmul %70, %70, %cst_42 {dimension_numbers = #tpu.dot_dimension_numbers<[1], [1], [0], [0], [0, 0, 1, 0], [], []>} : vector<16x16xf32>, vector<16x16xf32>, vector<16x16xf32> -> vector<16x16xf32>
    %cst_43 = arith.constant 6.250000e-02 : f32
    %76 = vector.broadcast %cst_43 : f32 to vector<16x1xf32>
    %77 = arith.mulf %74, %76 : vector<16x1xf32>
    %cst_44 = arith.constant dense<0.000000e+00> : vector<16x1xf32>
    %78 = tpu.matmul %72, %77, %cst_44 {dimension_numbers = #tpu.dot_dimension_numbers<[1], [0], [0], [1], [0, 0, 1, 1], [], []>} : vector<16x16xf32>, vector<16x1xf32>, vector<16x1xf32> -> vector<16x1xf32>
    %cst_45 = arith.constant dense<0.000000e+00> : vector<16x16xf32>
    %79 = tpu.matmul %72, %75, %cst_45 {dimension_numbers = #tpu.dot_dimension_numbers<[1], [0], [0], [1], [0, 0, 1, 1], [], []>} : vector<16x16xf32>, vector<16x16xf32>, vector<16x16xf32> -> vector<16x16xf32>
    %cst_46 = arith.constant 6.250000e-02 : f32
    %80 = vector.broadcast %cst_46 : f32 to vector<16x16xf32>
    %81 = arith.mulf %79, %80 : vector<16x16xf32>
    %82 = arith.mulf %81, %72 : vector<16x16xf32>
    %cst_47 = arith.constant dense<0.000000e+00> : vector<16xf32>
    %83 = vector.multi_reduction <add>, %82, %cst_47 [1] : vector<16x16xf32> to vector<16xf32>
    %84 = vector.shape_cast %83 : vector<16xf32> to vector<16x1xf32>
    %85 = arith.mulf %78, %78 : vector<16x1xf32>
    %86 = arith.subf %84, %85 : vector<16x1xf32>
    %cst_48 = arith.constant 0.000000e+00 : f32
    %87 = vector.broadcast %cst_48 : f32 to vector<16x1xf32>
    %88 = arith.maximumf %86, %87 : vector<16x1xf32>
    %c2_49 = arith.constant 2 : index
    %c0_50 = arith.constant 0 : index
    %c0_51 = arith.constant 0 : index
    %89 = vector.load %arg2[%c2_49, %c0_50, %c0_51] : memref<6x16x1xf32, #tpu.memory_space<vmem>>, vector<1x16x1xf32>
    %90 = vector.shape_cast %89 : vector<1x16x1xf32> to vector<16x1xf32>
    %cst_52 = arith.constant 9.99999974E-6 : f32
    %91 = vector.broadcast %cst_52 : f32 to vector<16x1xf32>
    %92 = arith.addf %88, %91 : vector<16x1xf32>
    %93 = math.rsqrt %92 : vector<16x1xf32>
    %94 = arith.mulf %90, %93 : vector<16x1xf32>
    %c2_53 = arith.constant 2 : index
    %c0_54 = arith.constant 0 : index
    %c0_55 = arith.constant 0 : index
    %95 = vector.load %arg3[%c2_53, %c0_54, %c0_55] : memref<6x16x1xf32, #tpu.memory_space<vmem>>, vector<1x16x1xf32>
    %96 = vector.shape_cast %95 : vector<1x16x1xf32> to vector<16x1xf32>
    %97 = arith.mulf %78, %94 : vector<16x1xf32>
    %98 = arith.subf %96, %97 : vector<16x1xf32>
    %99 = vector.broadcast %94 : vector<16x1xf32> to vector<16x16xf32>
    %100 = arith.mulf %99, %72 : vector<16x16xf32>
    %cst_56 = arith.constant dense<0.000000e+00> : vector<16x16xf32>
    %101 = tpu.matmul %100, %70, %cst_56 {dimension_numbers = #tpu.dot_dimension_numbers<[1], [0], [0], [1], [0, 0, 1, 1], [], []>} : vector<16x16xf32>, vector<16x16xf32>, vector<16x16xf32> -> vector<16x16xf32>
    %102 = vector.broadcast %98 : vector<16x1xf32> to vector<16x16xf32>
    %103 = arith.addf %101, %102 : vector<16x16xf32>
    %cst_57 = arith.constant 0.000000e+00 : f32
    %104 = vector.broadcast %cst_57 : f32 to vector<16x16xf32>
    %105 = arith.maximumf %103, %104 : vector<16x16xf32>
    %c3 = arith.constant 3 : index
    %c0_58 = arith.constant 0 : index
    %c0_59 = arith.constant 0 : index
    %106 = vector.load %arg1[%c3, %c0_58, %c0_59] : memref<6x16x16xf32, #tpu.memory_space<vmem>>, vector<1x16x16xf32>
    %107 = vector.shape_cast %106 : vector<1x16x16xf32> to vector<16x16xf32>
    %cst_60 = arith.constant dense<0.000000e+00> : vector<16xf32>
    %108 = vector.multi_reduction <add>, %105, %cst_60 [1] : vector<16x16xf32> to vector<16xf32>
    %109 = vector.shape_cast %108 : vector<16xf32> to vector<16x1xf32>
    %cst_61 = arith.constant dense<0.000000e+00> : vector<16x16xf32>
    %110 = tpu.matmul %105, %105, %cst_61 {dimension_numbers = #tpu.dot_dimension_numbers<[1], [1], [0], [0], [0, 0, 1, 0], [], []>} : vector<16x16xf32>, vector<16x16xf32>, vector<16x16xf32> -> vector<16x16xf32>
    %cst_62 = arith.constant 6.250000e-02 : f32
    %111 = vector.broadcast %cst_62 : f32 to vector<16x1xf32>
    %112 = arith.mulf %109, %111 : vector<16x1xf32>
    %cst_63 = arith.constant dense<0.000000e+00> : vector<16x1xf32>
    %113 = tpu.matmul %107, %112, %cst_63 {dimension_numbers = #tpu.dot_dimension_numbers<[1], [0], [0], [1], [0, 0, 1, 1], [], []>} : vector<16x16xf32>, vector<16x1xf32>, vector<16x1xf32> -> vector<16x1xf32>
    %cst_64 = arith.constant dense<0.000000e+00> : vector<16x16xf32>
    %114 = tpu.matmul %107, %110, %cst_64 {dimension_numbers = #tpu.dot_dimension_numbers<[1], [0], [0], [1], [0, 0, 1, 1], [], []>} : vector<16x16xf32>, vector<16x16xf32>, vector<16x16xf32> -> vector<16x16xf32>
    %cst_65 = arith.constant 6.250000e-02 : f32
    %115 = vector.broadcast %cst_65 : f32 to vector<16x16xf32>
    %116 = arith.mulf %114, %115 : vector<16x16xf32>
    %117 = arith.mulf %116, %107 : vector<16x16xf32>
    %cst_66 = arith.constant dense<0.000000e+00> : vector<16xf32>
    %118 = vector.multi_reduction <add>, %117, %cst_66 [1] : vector<16x16xf32> to vector<16xf32>
    %119 = vector.shape_cast %118 : vector<16xf32> to vector<16x1xf32>
    %120 = arith.mulf %113, %113 : vector<16x1xf32>
    %121 = arith.subf %119, %120 : vector<16x1xf32>
    %cst_67 = arith.constant 0.000000e+00 : f32
    %122 = vector.broadcast %cst_67 : f32 to vector<16x1xf32>
    %123 = arith.maximumf %121, %122 : vector<16x1xf32>
    %c3_68 = arith.constant 3 : index
    %c0_69 = arith.constant 0 : index
    %c0_70 = arith.constant 0 : index
    %124 = vector.load %arg2[%c3_68, %c0_69, %c0_70] : memref<6x16x1xf32, #tpu.memory_space<vmem>>, vector<1x16x1xf32>
    %125 = vector.shape_cast %124 : vector<1x16x1xf32> to vector<16x1xf32>
    %cst_71 = arith.constant 9.99999974E-6 : f32
    %126 = vector.broadcast %cst_71 : f32 to vector<16x1xf32>
    %127 = arith.addf %123, %126 : vector<16x1xf32>
    %128 = math.rsqrt %127 : vector<16x1xf32>
    %129 = arith.mulf %125, %128 : vector<16x1xf32>
    %c3_72 = arith.constant 3 : index
    %c0_73 = arith.constant 0 : index
    %c0_74 = arith.constant 0 : index
    %130 = vector.load %arg3[%c3_72, %c0_73, %c0_74] : memref<6x16x1xf32, #tpu.memory_space<vmem>>, vector<1x16x1xf32>
    %131 = vector.shape_cast %130 : vector<1x16x1xf32> to vector<16x1xf32>
    %132 = arith.mulf %113, %129 : vector<16x1xf32>
    %133 = arith.subf %131, %132 : vector<16x1xf32>
    %134 = vector.broadcast %129 : vector<16x1xf32> to vector<16x16xf32>
    %135 = arith.mulf %134, %107 : vector<16x16xf32>
    %cst_75 = arith.constant dense<0.000000e+00> : vector<16x16xf32>
    %136 = tpu.matmul %135, %105, %cst_75 {dimension_numbers = #tpu.dot_dimension_numbers<[1], [0], [0], [1], [0, 0, 1, 1], [], []>} : vector<16x16xf32>, vector<16x16xf32>, vector<16x16xf32> -> vector<16x16xf32>
    %137 = vector.broadcast %133 : vector<16x1xf32> to vector<16x16xf32>
    %138 = arith.addf %136, %137 : vector<16x16xf32>
    %cst_76 = arith.constant 0.000000e+00 : f32
    %139 = vector.broadcast %cst_76 : f32 to vector<16x16xf32>
    %140 = arith.maximumf %138, %139 : vector<16x16xf32>
    %c4 = arith.constant 4 : index
    %c0_77 = arith.constant 0 : index
    %c0_78 = arith.constant 0 : index
    %141 = vector.load %arg1[%c4, %c0_77, %c0_78] : memref<6x16x16xf32, #tpu.memory_space<vmem>>, vector<1x16x16xf32>
    %142 = vector.shape_cast %141 : vector<1x16x16xf32> to vector<16x16xf32>
    %cst_79 = arith.constant dense<0.000000e+00> : vector<16xf32>
    %143 = vector.multi_reduction <add>, %140, %cst_79 [1] : vector<16x16xf32> to vector<16xf32>
    %144 = vector.shape_cast %143 : vector<16xf32> to vector<16x1xf32>
    %cst_80 = arith.constant dense<0.000000e+00> : vector<16x16xf32>
    %145 = tpu.matmul %140, %140, %cst_80 {dimension_numbers = #tpu.dot_dimension_numbers<[1], [1], [0], [0], [0, 0, 1, 0], [], []>} : vector<16x16xf32>, vector<16x16xf32>, vector<16x16xf32> -> vector<16x16xf32>
    %cst_81 = arith.constant 6.250000e-02 : f32
    %146 = vector.broadcast %cst_81 : f32 to vector<16x1xf32>
    %147 = arith.mulf %144, %146 : vector<16x1xf32>
    %cst_82 = arith.constant dense<0.000000e+00> : vector<16x1xf32>
    %148 = tpu.matmul %142, %147, %cst_82 {dimension_numbers = #tpu.dot_dimension_numbers<[1], [0], [0], [1], [0, 0, 1, 1], [], []>} : vector<16x16xf32>, vector<16x1xf32>, vector<16x1xf32> -> vector<16x1xf32>
    %cst_83 = arith.constant dense<0.000000e+00> : vector<16x16xf32>
    %149 = tpu.matmul %142, %145, %cst_83 {dimension_numbers = #tpu.dot_dimension_numbers<[1], [0], [0], [1], [0, 0, 1, 1], [], []>} : vector<16x16xf32>, vector<16x16xf32>, vector<16x16xf32> -> vector<16x16xf32>
    %cst_84 = arith.constant 6.250000e-02 : f32
    %150 = vector.broadcast %cst_84 : f32 to vector<16x16xf32>
    %151 = arith.mulf %149, %150 : vector<16x16xf32>
    %152 = arith.mulf %151, %142 : vector<16x16xf32>
    %cst_85 = arith.constant dense<0.000000e+00> : vector<16xf32>
    %153 = vector.multi_reduction <add>, %152, %cst_85 [1] : vector<16x16xf32> to vector<16xf32>
    %154 = vector.shape_cast %153 : vector<16xf32> to vector<16x1xf32>
    %155 = arith.mulf %148, %148 : vector<16x1xf32>
    %156 = arith.subf %154, %155 : vector<16x1xf32>
    %cst_86 = arith.constant 0.000000e+00 : f32
    %157 = vector.broadcast %cst_86 : f32 to vector<16x1xf32>
    %158 = arith.maximumf %156, %157 : vector<16x1xf32>
    %c4_87 = arith.constant 4 : index
    %c0_88 = arith.constant 0 : index
    %c0_89 = arith.constant 0 : index
    %159 = vector.load %arg2[%c4_87, %c0_88, %c0_89] : memref<6x16x1xf32, #tpu.memory_space<vmem>>, vector<1x16x1xf32>
    %160 = vector.shape_cast %159 : vector<1x16x1xf32> to vector<16x1xf32>
    %cst_90 = arith.constant 9.99999974E-6 : f32
    %161 = vector.broadcast %cst_90 : f32 to vector<16x1xf32>
    %162 = arith.addf %158, %161 : vector<16x1xf32>
    %163 = math.rsqrt %162 : vector<16x1xf32>
    %164 = arith.mulf %160, %163 : vector<16x1xf32>
    %c4_91 = arith.constant 4 : index
    %c0_92 = arith.constant 0 : index
    %c0_93 = arith.constant 0 : index
    %165 = vector.load %arg3[%c4_91, %c0_92, %c0_93] : memref<6x16x1xf32, #tpu.memory_space<vmem>>, vector<1x16x1xf32>
    %166 = vector.shape_cast %165 : vector<1x16x1xf32> to vector<16x1xf32>
    %167 = arith.mulf %148, %164 : vector<16x1xf32>
    %168 = arith.subf %166, %167 : vector<16x1xf32>
    %169 = vector.broadcast %164 : vector<16x1xf32> to vector<16x16xf32>
    %170 = arith.mulf %169, %142 : vector<16x16xf32>
    %cst_94 = arith.constant dense<0.000000e+00> : vector<16x16xf32>
    %171 = tpu.matmul %170, %140, %cst_94 {dimension_numbers = #tpu.dot_dimension_numbers<[1], [0], [0], [1], [0, 0, 1, 1], [], []>} : vector<16x16xf32>, vector<16x16xf32>, vector<16x16xf32> -> vector<16x16xf32>
    %172 = vector.broadcast %168 : vector<16x1xf32> to vector<16x16xf32>
    %173 = arith.addf %171, %172 : vector<16x16xf32>
    %cst_95 = arith.constant 0.000000e+00 : f32
    %174 = vector.broadcast %cst_95 : f32 to vector<16x16xf32>
    %175 = arith.maximumf %173, %174 : vector<16x16xf32>
    %c5 = arith.constant 5 : index
    %c0_96 = arith.constant 0 : index
    %c0_97 = arith.constant 0 : index
    %176 = vector.load %arg1[%c5, %c0_96, %c0_97] : memref<6x16x16xf32, #tpu.memory_space<vmem>>, vector<1x16x16xf32>
    %177 = vector.shape_cast %176 : vector<1x16x16xf32> to vector<16x16xf32>
    %cst_98 = arith.constant dense<0.000000e+00> : vector<16xf32>
    %178 = vector.multi_reduction <add>, %175, %cst_98 [1] : vector<16x16xf32> to vector<16xf32>
    %179 = vector.shape_cast %178 : vector<16xf32> to vector<16x1xf32>
    %cst_99 = arith.constant dense<0.000000e+00> : vector<16x16xf32>
    %180 = tpu.matmul %175, %175, %cst_99 {dimension_numbers = #tpu.dot_dimension_numbers<[1], [1], [0], [0], [0, 0, 1, 0], [], []>} : vector<16x16xf32>, vector<16x16xf32>, vector<16x16xf32> -> vector<16x16xf32>
    %cst_100 = arith.constant 6.250000e-02 : f32
    %181 = vector.broadcast %cst_100 : f32 to vector<16x1xf32>
    %182 = arith.mulf %179, %181 : vector<16x1xf32>
    %cst_101 = arith.constant dense<0.000000e+00> : vector<16x1xf32>
    %183 = tpu.matmul %177, %182, %cst_101 {dimension_numbers = #tpu.dot_dimension_numbers<[1], [0], [0], [1], [0, 0, 1, 1], [], []>} : vector<16x16xf32>, vector<16x1xf32>, vector<16x1xf32> -> vector<16x1xf32>
    %cst_102 = arith.constant dense<0.000000e+00> : vector<16x16xf32>
    %184 = tpu.matmul %177, %180, %cst_102 {dimension_numbers = #tpu.dot_dimension_numbers<[1], [0], [0], [1], [0, 0, 1, 1], [], []>} : vector<16x16xf32>, vector<16x16xf32>, vector<16x16xf32> -> vector<16x16xf32>
    %cst_103 = arith.constant 6.250000e-02 : f32
    %185 = vector.broadcast %cst_103 : f32 to vector<16x16xf32>
    %186 = arith.mulf %184, %185 : vector<16x16xf32>
    %187 = arith.mulf %186, %177 : vector<16x16xf32>
    %cst_104 = arith.constant dense<0.000000e+00> : vector<16xf32>
    %188 = vector.multi_reduction <add>, %187, %cst_104 [1] : vector<16x16xf32> to vector<16xf32>
    %189 = vector.shape_cast %188 : vector<16xf32> to vector<16x1xf32>
    %190 = arith.mulf %183, %183 : vector<16x1xf32>
    %191 = arith.subf %189, %190 : vector<16x1xf32>
    %cst_105 = arith.constant 0.000000e+00 : f32
    %192 = vector.broadcast %cst_105 : f32 to vector<16x1xf32>
    %193 = arith.maximumf %191, %192 : vector<16x1xf32>
    %c5_106 = arith.constant 5 : index
    %c0_107 = arith.constant 0 : index
    %c0_108 = arith.constant 0 : index
    %194 = vector.load %arg2[%c5_106, %c0_107, %c0_108] : memref<6x16x1xf32, #tpu.memory_space<vmem>>, vector<1x16x1xf32>
    %195 = vector.shape_cast %194 : vector<1x16x1xf32> to vector<16x1xf32>
    %cst_109 = arith.constant 9.99999974E-6 : f32
    %196 = vector.broadcast %cst_109 : f32 to vector<16x1xf32>
    %197 = arith.addf %193, %196 : vector<16x1xf32>
    %198 = math.rsqrt %197 : vector<16x1xf32>
    %199 = arith.mulf %195, %198 : vector<16x1xf32>
    %c5_110 = arith.constant 5 : index
    %c0_111 = arith.constant 0 : index
    %c0_112 = arith.constant 0 : index
    %200 = vector.load %arg3[%c5_110, %c0_111, %c0_112] : memref<6x16x1xf32, #tpu.memory_space<vmem>>, vector<1x16x1xf32>
    %201 = vector.shape_cast %200 : vector<1x16x1xf32> to vector<16x1xf32>
    %202 = arith.mulf %183, %199 : vector<16x1xf32>
    %203 = arith.subf %201, %202 : vector<16x1xf32>
    %204 = vector.broadcast %199 : vector<16x1xf32> to vector<16x16xf32>
    %205 = arith.mulf %204, %177 : vector<16x16xf32>
    %cst_113 = arith.constant dense<0.000000e+00> : vector<16x16xf32>
    %206 = tpu.matmul %205, %175, %cst_113 {dimension_numbers = #tpu.dot_dimension_numbers<[1], [0], [0], [1], [0, 0, 1, 1], [], []>} : vector<16x16xf32>, vector<16x16xf32>, vector<16x16xf32> -> vector<16x16xf32>
    %207 = vector.broadcast %203 : vector<16x1xf32> to vector<16x16xf32>
    %208 = arith.addf %206, %207 : vector<16x16xf32>
    %cst_114 = arith.constant 0.000000e+00 : f32
    %209 = vector.broadcast %cst_114 : f32 to vector<16x16xf32>
    %210 = arith.maximumf %208, %209 : vector<16x16xf32>
    %c0_115 = arith.constant 0 : index
    %c0_116 = arith.constant 0 : index
    %211 = vector.load %arg4[%c0_115, %c0_116] : memref<16x16xf32, #tpu.memory_space<vmem>>, vector<16x16xf32>
    %cst_117 = arith.constant dense<0.000000e+00> : vector<16x16xf32>
    %212 = tpu.matmul %211, %210, %cst_117 {dimension_numbers = #tpu.dot_dimension_numbers<[1], [0], [0], [1], [0, 0, 1, 1], [], []>} : vector<16x16xf32>, vector<16x16xf32>, vector<16x16xf32> -> vector<16x16xf32>
    %c0_118 = arith.constant 0 : index
    %c0_119 = arith.constant 0 : index
    %213 = vector.load %arg5[%c0_118, %c0_119] : memref<16x1xf32, #tpu.memory_space<vmem>>, vector<16x1xf32>
    %214 = vector.broadcast %213 : vector<16x1xf32> to vector<16x16xf32>
    %215 = arith.addf %212, %214 : vector<16x16xf32>
    %c0_120 = arith.constant 0 : index
    %c0_121 = arith.constant 0 : index
    %216 = vector.load %arg6[%c0_120, %c0_121] : memref<16x16xf32, #tpu.memory_space<vmem>>, vector<16x16xf32>
    tpu.vector_store %arg6[%c0_120, %c0_121], %215 {strides = array<i32>} : memref<16x16xf32, #tpu.memory_space<vmem>>, vector<16x16xf32>,
    return
  }
}

</mosaic_0001>

<llo_original>
// kernel: tpu_custom_call.1
$region0: #{tpu_custom_call.1}
  #allocation0 [shape = 'u32[]', space=smem, size = 0x4, offset = 0x4, fixed_abs, tag = 'smem constant byte address 0x4 - core index']
  #allocation1 [shape = 'u32[144,128]{1,0:T(1,128)}', space=vmem, size = 0x12000, scoped, tag = 'internal scratch']
  %s0 = inlined_call_operand.vmem [shape: f32[16,16], index: 0, kind: input, shape index: {}]
  %s1 = inlined_call_operand.vmem [shape: f32[6,16,16], index: 1, kind: input, shape index: {}]
  %s2 = inlined_call_operand.vmem [shape: f32[6,16,1], index: 2, kind: input, shape index: {}]
  %s3 = inlined_call_operand.vmem [shape: f32[6,16,1], index: 3, kind: input, shape index: {}]
  %s4 = inlined_call_operand.vmem [shape: f32[16,16], index: 4, kind: input, shape index: {}]
  %s5 = inlined_call_operand.vmem [shape: f32[16,1], index: 5, kind: input, shape index: {}]
  %s6 = inlined_call_operand.hbm [shape: f32[16,16], index: 6, kind: output, shape index: {}]
  %s7 = sld [smem:[#allocation0]]
  $region34: #{tpu_custom_call.1} parent=0
    _
  %s9 = ssub.s32 1, %s7
  %s10 = scalar_select 0, %s9, %s7
  $region1: #{tpu_custom_call.1} parent=0
    #allocation2 [shape = 'u8[8192]{0}', space=vmem, size = 0x2000, scoped, tag = 'output window, operand 0, single buffered']
    #allocation3 [shape = 's32[1]{0}', space=sflag, size = 0x4, scoped, tag = 'scoped memory for tpu_custom_call.1']
    %11 = vsyncpa [#allocation3], 0
    // Predicated region
    $region2: #{tpu_custom_call.1} parent=1 // pred_check
      _
    $region3: #{tpu_custom_call.1} parent=1 // pred_check_branch
      %13 = sbr.rel (0) target = $region5
    $region4: #{tpu_custom_call.1} parent=1 // pred_region
      _
    $region5: #{tpu_custom_call.1} parent=1 // pred_fallthru
      _
    // Predicated region
    $region6: #{tpu_custom_call.1} parent=1 // pred_check
      _
    $region7: #{tpu_custom_call.1} parent=1 // pred_check_branch
      %15 = sbr.rel (0) target = $region9
    $region8: #{tpu_custom_call.1} parent=1 // pred_region
      _
    $region9: #{tpu_custom_call.1} parent=1 // pred_fallthru
      _
    // Predicated region
    $region10: #{tpu_custom_call.1} parent=1 // pred_check
      _
    $region11: #{tpu_custom_call.1} parent=1 // pred_check_branch
      %17 = sbr.rel (0) target = $region13
    $region12: #{tpu_custom_call.1} parent=1 // pred_region
      _
    $region13: #{tpu_custom_call.1} parent=1 // pred_fallthru
      _
    // Predicated region
    $region14: #{tpu_custom_call.1} parent=1 // pred_check
      _
    $region15: #{tpu_custom_call.1} parent=1 // pred_check_branch
      %19 = sbr.rel (0) target = $region17
    $region16: #{tpu_custom_call.1} parent=1 // pred_region
      _
    $region17: #{tpu_custom_call.1} parent=1 // pred_fallthru
      _
    // Predicated region
    $region18: #{tpu_custom_call.1} parent=1 // pred_check
      _
    $region19: #{tpu_custom_call.1} parent=1 // pred_check_branch
      %21 = sbr.rel (0) target = $region21
    $region20: #{tpu_custom_call.1} parent=1 // pred_region
      _
    $region21: #{tpu_custom_call.1} parent=1 // pred_fallthru
      _
    // Predicated region
    $region22: #{tpu_custom_call.1} parent=1 // pred_check
      _
    $region23: #{tpu_custom_call.1} parent=1 // pred_check_branch
      %23 = sbr.rel (0) target = $region25
    $region24: #{tpu_custom_call.1} parent=1 // pred_region
      _
    $region25: #{tpu_custom_call.1} parent=1 // pred_fallthru
      _
    %v24 = vld [vmem:[%s0] sm:$0xff]
    %v25 = vld [vmem:[%s0 + $0x8] sm:$0xff]
    %v26 = vld [vmem:[%s1] sm:$0xff]
    %v27 = vld [vmem:[%s1 + $0x8] sm:$0xff]
    %vm28 = vcmask 130048
    %v29 = vsel %vm28, %v24, 0.0
    %30 = vadd.xlane.f32.xlu0 %v29
    %v31 = vpop.xlane.xlu0 %30
    %v32 = vsel %vm28, %v25, 0.0
    %33 = vadd.xlane.f32.xlu0 %v32
    %v34 = vpop.xlane.xlu0 %33
    %v36 = vsel %vm28, %v24, 0
    %v39 = vsel %vm28, %v25, 0
    %41 = vmatprep.subr.mxu0 0.0
    %42 = vmatpush1.xpose.msra.mxu0 %v36
    %43 = vmatprep.subr.mxu0 0.0
    %44 = vmatpush1.xpose.msra.mxu0 %v39
    %45 = vmatprep.subr.mxu0 0.0
    %46 = vmatpush1.xpose.msra.mxu0 0.0
    %47 = vmatprep.subr.mxu0 0.0
    %48 = vmatpush1.xpose.msra.mxu0 0.0
    %49 = vmatprep.subr.mxu0 0.0
    %50 = vmatpush1.xpose.msra.mxu0 0.0
    %51 = vmatprep.subr.mxu0 0.0
    %52 = vmatpush1.xpose.msra.mxu0 0.0
    %53 = vmatprep.subr.mxu0 0.0
    %54 = vmatpush1.xpose.msra.mxu0 0.0
    %55 = vmatprep.subr.mxu0 0.0
    %56 = vmatpush1.xpose.msra.mxu0 0.0
    %57 = vmatprep.subr.mxu0 0.0
    %58 = vmatpush1.xpose.msra.mxu0 0.0
    %59 = vmatprep.subr.mxu0 0.0
    %60 = vmatpush1.xpose.msra.mxu0 0.0
    %61 = vmatprep.subr.mxu0 0.0
    %62 = vmatpush1.xpose.msra.mxu0 0.0
    %63 = vmatprep.subr.mxu0 0.0
    %64 = vmatpush1.xpose.msra.mxu0 0.0
    %65 = vmatprep.subr.mxu0 0.0
    %66 = vmatpush1.xpose.msra.mxu0 0.0
    %67 = vmatprep.subr.mxu0 0.0
    %68 = vmatpush1.xpose.msra.mxu0 0.0
    %69 = vmatprep.subr.mxu0 0.0
    %70 = vmatpush1.xpose.msra.mxu0 0.0
    %71 = vmatprep.subr.mxu0 0.0
    %72 = vmatpush1.xpose.msra.mxu0 0.0
    %73 = vmatprep.subr.mxu0 0.0
    %74 = vmatpush1.xpose.msra.mxu0 0.0
    %75 = vmatprep.subr.mxu0 0.0
    %76 = vmatpush1.xpose.msra.mxu0 0.0
    %77 = vmatprep.subr.mxu0 0.0
    %78 = vmatpush1.xpose.msra.mxu0 0.0
    %79 = vmatprep.subr.mxu0 0.0
    %80 = vmatpush1.xpose.msra.mxu0 0.0
    %81 = vmatprep.subr.mxu0 0.0
    %82 = vmatpush1.xpose.msra.mxu0 0.0
    %83 = vmatprep.subr.mxu0 0.0
    %84 = vmatpush1.xpose.msra.mxu0 0.0
    %85 = vmatprep.subr.mxu0 0.0
    %86 = vmatpush1.xpose.msra.mxu0 0.0
    %87 = vmatprep.subr.mxu0 0.0
    %88 = vmatpush1.xpose.msra.mxu0 0.0
    %89 = vmatprep.subr.mxu0 0.0
    %90 = vmatpush1.xpose.msra.mxu0 0.0
    %91 = vmatprep.subr.mxu0 0.0
    %92 = vmatpush1.xpose.msra.mxu0 0.0
    %93 = vmatprep.subr.mxu0 0.0
    %94 = vmatpush1.xpose.msra.mxu0 0.0
    %95 = vmatprep.subr.mxu0 0.0
    %96 = vmatpush1.xpose.msra.mxu0 0.0
    %97 = vmatprep.subr.mxu0 0.0
    %98 = vmatpush1.xpose.msra.mxu0 0.0
    %99 = vmatprep.subr.mxu0 0.0
    %100 = vmatpush1.xpose.msra.mxu0 0.0
    %101 = vmatprep.subr.mxu0 0.0
    %102 = vmatpush1.xpose.msra.mxu0 0.0
    %103 = vmatprep.subr.mxu0 0.0
    %104 = vmatpush1.xpose.msra.mxu0 0.0
    %105 = vmatprep.mubr.f32.mxu0 0.0
    %106 = vmatmul.mubr.f32.gmra.mrb[0].mxu0 %v36
    %v107 = vpop.f32.mrb[0].mxu0
    %v108 = vadd.f32 0.0, %v107
    %v109 = vpop.f32.mrb[0].mxu0
    %110 = vmatprep.mubr.f32.mxu0 0.0
    %111 = vmatmul.mubr.f32.gmra.mrb[0].mxu0 %v39
    %v112 = vpop.f32.mrb[0].mxu0
    %v113 = vadd.f32 0.0, %v112
    %v114 = vpop.f32.mrb[0].mxu0
    %115 = vdwg.mxu0
    %v116 = vmul.f32 %v31, 0.0625
    %v117 = vmul.f32 %v34, 0.0625
    %v119 = vsel %vm28, %v26, 0
    %v122 = vsel %vm28, %v27, 0
    %124 = vmatprep.subr.mxu0 0.0
    %125 = vmatpush1.msra.mxu0 %v116
    %126 = vmatprep.subr.mxu0 0.0
    %127 = vmatpush1.msra.mxu0 %v117
    %128 = vmatprep.subr.mxu0 0.0
    %129 = vmatpush1.msra.mxu0 0.0
    %130 = vmatprep.subr.mxu0 0.0
    %131 = vmatpush1.msra.mxu0 0.0
    %132 = vmatprep.subr.mxu0 0.0
    %133 = vmatpush1.msra.mxu0 0.0
    %134 = vmatprep.subr.mxu0 0.0
    %135 = vmatpush1.msra.mxu0 0.0
    %136 = vmatprep.subr.mxu0 0.0
    %137 = vmatpush1.msra.mxu0 0.0
    %138 = vmatprep.subr.mxu0 0.0
    %139 = vmatpush1.msra.mxu0 0.0
    %140 = vmatprep.subr.mxu0 0.0
    %141 = vmatpush1.msra.mxu0 0.0
    %142 = vmatprep.subr.mxu0 0.0
    %143 = vmatpush1.msra.mxu0 0.0
    %144 = vmatprep.subr.mxu0 0.0
    %145 = vmatpush1.msra.mxu0 0.0
    %146 = vmatprep.subr.mxu0 0.0
    %147 = vmatpush1.msra.mxu0 0.0
    %148 = vmatprep.subr.mxu0 0.0
    %149 = vmatpush1.msra.mxu0 0.0
    %150 = vmatprep.subr.mxu0 0.0
    %151 = vmatpush1.msra.mxu0 0.0
    %152 = vmatprep.subr.mxu0 0.0
    %153 = vmatpush1.msra.mxu0 0.0
    %154 = vmatprep.subr.mxu0 0.0
    %155 = vmatpush1.msra.mxu0 0.0
    %156 = vmatprep.subr.mxu0 0.0
    %157 = vmatpush1.msra.mxu0 0.0
    %158 = vmatprep.subr.mxu0 0.0
    %159 = vmatpush1.msra.mxu0 0.0
    %160 = vmatprep.subr.mxu0 0.0
    %161 = vmatpush1.msra.mxu0 0.0
    %162 = vmatprep.subr.mxu0 0.0
    %163 = vmatpush1.msra.mxu0 0.0
    %164 = vmatprep.subr.mxu0 0.0
    %165 = vmatpush1.msra.mxu0 0.0
    %166 = vmatprep.subr.mxu0 0.0
    %167 = vmatpush1.msra.mxu0 0.0
    %168 = vmatprep.subr.mxu0 0.0
    %169 = vmatpush1.msra.mxu0 0.0
    %170 = vmatprep.subr.mxu0 0.0
    %171 = vmatpush1.msra.mxu0 0.0
    %172 = vmatprep.subr.mxu0 0.0
    %173 = vmatpush1.msra.mxu0 0.0
    %174 = vmatprep.subr.mxu0 0.0
    %175 = vmatpush1.msra.mxu0 0.0
    %176 = vmatprep.subr.mxu0 0.0
    %177 = vmatpush1.msra.mxu0 0.0
    %178 = vmatprep.subr.mxu0 0.0
    %179 = vmatpush1.msra.mxu0 0.0
    %180 = vmatprep.subr.mxu0 0.0
    %181 = vmatpush1.msra.mxu0 0.0
    %182 = vmatprep.subr.mxu0 0.0
    %183 = vmatpush1.msra.mxu0 0.0
    %184 = vmatprep.subr.mxu0 0.0
    %185 = vmatpush1.msra.mxu0 0.0
    %186 = vmatprep.subr.mxu0 0.0
    %187 = vmatpush1.msra.mxu0 0.0
    %188 = vmatprep.mubr.f32.mxu0 0.0
    %189 = vmatmul.mubr.f32.gmra.mrb[0].mxu0 %v119
    %v190 = vpop.f32.mrb[0].mxu0
    %v191 = vadd.f32 0.0, %v190
    %v192 = vpop.f32.mrb[0].mxu0
    %193 = vmatprep.mubr.f32.mxu0 0.0
    %194 = vmatmul.mubr.f32.gmra.mrb[0].mxu0 %v122
    %v195 = vpop.f32.mrb[0].mxu0
    %v196 = vadd.f32 0.0, %v195
    %v197 = vpop.f32.mrb[0].mxu0
    %198 = vdwg.mxu0
    %199 = vmatprep.subr.mxu0 0.0
    %200 = vmatpush1.msra.mxu0 %v108
    %201 = vmatprep.subr.mxu0 0.0
    %202 = vmatpush1.msra.mxu0 %v113
    %203 = vmatprep.subr.mxu0 0.0
    %204 = vmatpush1.msra.mxu0 0.0
    %205 = vmatprep.subr.mxu0 0.0
    %206 = vmatpush1.msra.mxu0 0.0
    %207 = vmatprep.subr.mxu0 0.0
    %208 = vmatpush1.msra.mxu0 0.0
    %209 = vmatprep.subr.mxu0 0.0
    %210 = vmatpush1.msra.mxu0 0.0
    %211 = vmatprep.subr.mxu0 0.0
    %212 = vmatpush1.msra.mxu0 0.0
    %213 = vmatprep.subr.mxu0 0.0
    %214 = vmatpush1.msra.mxu0 0.0
    %215 = vmatprep.subr.mxu0 0.0
    %216 = vmatpush1.msra.mxu0 0.0
    %217 = vmatprep.subr.mxu0 0.0
    %218 = vmatpush1.msra.mxu0 0.0
    %219 = vmatprep.subr.mxu0 0.0
    %220 = vmatpush1.msra.mxu0 0.0
    %221 = vmatprep.subr.mxu0 0.0
    %222 = vmatpush1.msra.mxu0 0.0
    %223 = vmatprep.subr.mxu0 0.0
    %224 = vmatpush1.msra.mxu0 0.0
    %225 = vmatprep.subr.mxu0 0.0
    %226 = vmatpush1.msra.mxu0 0.0
    %227 = vmatprep.subr.mxu0 0.0
    %228 = vmatpush1.msra.mxu0 0.0
    %229 = vmatprep.subr.mxu0 0.0
    %230 = vmatpush1.msra.mxu0 0.0
    %231 = vmatprep.subr.mxu0 0.0
    %232 = vmatpush1.msra.mxu0 0.0
    %233 = vmatprep.subr.mxu0 0.0
    %234 = vmatpush1.msra.mxu0 0.0
    %235 = vmatprep.subr.mxu0 0.0
    %236 = vmatpush1.msra.mxu0 0.0
    %237 = vmatprep.subr.mxu0 0.0
    %238 = vmatpush1.msra.mxu0 0.0
    %239 = vmatprep.subr.mxu0 0.0
    %240 = vmatpush1.msra.mxu0 0.0
    %241 = vmatprep.subr.mxu0 0.0
    %242 = vmatpush1.msra.mxu0 0.0
    %243 = vmatprep.subr.mxu0 0.0
    %244 = vmatpush1.msra.mxu0 0.0
    %245 = vmatprep.subr.mxu0 0.0
    %246 = vmatpush1.msra.mxu0 0.0
    %247 = vmatprep.subr.mxu0 0.0
    %248 = vmatpush1.msra.mxu0 0.0
    %249 = vmatprep.subr.mxu0 0.0
    %250 = vmatpush1.msra.mxu0 0.0
    %251 = vmatprep.subr.mxu0 0.0
    %252 = vmatpush1.msra.mxu0 0.0
    %253 = vmatprep.subr.mxu0 0.0
    %254 = vmatpush1.msra.mxu0 0.0
    %255 = vmatprep.subr.mxu0 0.0
    %256 = vmatpush1.msra.mxu0 0.0
    %257 = vmatprep.subr.mxu0 0.0
    %258 = vmatpush1.msra.mxu0 0.0
    %259 = vmatprep.subr.mxu0 0.0
    %260 = vmatpush1.msra.mxu0 0.0
    %261 = vmatprep.subr.mxu0 0.0
    %262 = vmatpush1.msra.mxu0 0.0
    %263 = vmatprep.mubr.f32.mxu0 0.0
    %264 = vmatmul.mubr.f32.gmra.mrb[0].mxu0 %v119
    %v265 = vpop.f32.mrb[0].mxu0
    %v266 = vadd.f32 0.0, %v265
    %v267 = vpop.f32.mrb[0].mxu0
    %268 = vmatprep.mubr.f32.mxu0 0.0
    %269 = vmatmul.mubr.f32.gmra.mrb[0].mxu0 %v122
    %v270 = vpop.f32.mrb[0].mxu0
    %v271 = vadd.f32 0.0, %v270
    %v272 = vpop.f32.mrb[0].mxu0
    %273 = vdwg.mxu0
    %v274 = vmul.f32 %v266, 0.0625
    %v275 = vmul.f32 %v271, 0.0625
    %v276 = vmul.f32 %v274, %v26
    %v277 = vmul.f32 %v275, %v27
    %v278 = vsel %vm28, %v276, 0.0
    %279 = vadd.xlane.f32.xlu0 %v278
    %v280 = vpop.xlane.xlu0 %279
    %v281 = vsel %vm28, %v277, 0.0
    %282 = vadd.xlane.f32.xlu0 %v281
    %v283 = vpop.xlane.xlu0 %282
    %v284 = vmul.f32 %v191, %v191
    %v285 = vmul.f32 %v196, %v196
    %v286 = vsub.f32 %v280, %v284
    %v287 = vsub.f32 %v283, %v285
    %v288 = vmax.f32 %v286, 0.0
    %v289 = vmax.f32 %v287, 0.0
    %v290 = vld [vmem:[%s2] sm:$0xff]
    %v291 = vld [vmem:[%s2 + $0x8] sm:$0xff]
    %v292 = vadd.f32 %v288, 1e-05
    %v293 = vadd.f32 %v289, 1e-05
    %v294 = vrsqrt.pop %v292
    %v295 = vrsqrt.pop %v293
    %v296 = vmul.f32 %v290, %v294
    %v297 = vmul.f32 %v291, %v295
    %v298 = vld [vmem:[%s3] sm:$0xff]
    %v299 = vld [vmem:[%s3 + $0x8] sm:$0xff]
    %v300 = vmul.f32 %v191, %v296
    %v301 = vmul.f32 %v196, %v297
    %v302 = vsub.f32 %v298, %v300
    %v303 = vsub.f32 %v299, %v301
    %305 = vset.pattern.permute.xlu0 0
    %306 = vperm.xlu0 %305, %v296
    %v307 = vpop.permute.xlu0 %306
    %310 = vset.pattern.permute.xlu0 0
    %311 = vperm.xlu0 %310, %v297
    %v312 = vpop.permute.xlu0 %311
    %v314 = vmul.f32 %v307, %v26
    %v315 = vmul.f32 %v312, %v27
    %317 = vset.pattern.permute.xlu0 0
    %318 = vperm.xlu0 %317, %v302
    %v319 = vpop.permute.xlu0 %318
    %322 = vset.pattern.permute.xlu0 0
    %323 = vperm.xlu0 %322, %v303
    %v324 = vpop.permute.xlu0 %323
    %v327 = vsel %vm28, %v314, 0
    %v330 = vsel %vm28, %v315, 0
    %332 = vmatprep.subr.mxu0 0.0
    %333 = vmatpush1.msra.mxu0 %v24
    %334 = vmatprep.subr.mxu0 0.0
    %335 = vmatpush1.msra.mxu0 %v25
    %336 = vmatprep.subr.mxu0 0.0
    %337 = vmatpush1.msra.mxu0 0.0
    %338 = vmatprep.subr.mxu0 0.0
    %339 = vmatpush1.msra.mxu0 0.0
    %340 = vmatprep.subr.mxu0 0.0
    %341 = vmatpush1.msra.mxu0 0.0
    %342 = vmatprep.subr.mxu0 0.0
    %343 = vmatpush1.msra.mxu0 0.0
    %344 = vmatprep.subr.mxu0 0.0
    %345 = vmatpush1.msra.mxu0 0.0
    %346 = vmatprep.subr.mxu0 0.0
    %347 = vmatpush1.msra.mxu0 0.0
    %348 = vmatprep.subr.mxu0 0.0
    %349 = vmatpush1.msra.mxu0 0.0
    %350 = vmatprep.subr.mxu0 0.0
    %351 = vmatpush1.msra.mxu0 0.0
    %352 = vmatprep.subr.mxu0 0.0
    %353 = vmatpush1.msra.mxu0 0.0
    %354 = vmatprep.subr.mxu0 0.0
    %355 = vmatpush1.msra.mxu0 0.0
    %356 = vmatprep.subr.mxu0 0.0
    %357 = vmatpush1.msra.mxu0 0.0
    %358 = vmatprep.subr.mxu0 0.0
    %359 = vmatpush1.msra.mxu0 0.0
    %360 = vmatprep.subr.mxu0 0.0
    %361 = vmatpush1.msra.mxu0 0.0
    %362 = vmatprep.subr.mxu0 0.0
    %363 = vmatpush1.msra.mxu0 0.0
    %364 = vmatprep.subr.mxu0 0.0
    %365 = vmatpush1.msra.mxu0 0.0
    %366 = vmatprep.subr.mxu0 0.0
    %367 = vmatpush1.msra.mxu0 0.0
    %368 = vmatprep.subr.mxu0 0.0
    %369 = vmatpush1.msra.mxu0 0.0
    %370 = vmatprep.subr.mxu0 0.0
    %371 = vmatpush1.msra.mxu0 0.0
    %372 = vmatprep.subr.mxu0 0.0
    %373 = vmatpush1.msra.mxu0 0.0
    %374 = vmatprep.subr.mxu0 0.0
    %375 = vmatpush1.msra.mxu0 0.0
    %376 = vmatprep.subr.mxu0 0.0
    %377 = vmatpush1.msra.mxu0 0.0
    %378 = vmatprep.subr.mxu0 0.0
    %379 = vmatpush1.msra.mxu0 0.0
    %380 = vmatprep.subr.mxu0 0.0
    %381 = vmatpush1.msra.mxu0 0.0
    %382 = vmatprep.subr.mxu0 0.0
    %383 = vmatpush1.msra.mxu0 0.0
    %384 = vmatprep.subr.mxu0 0.0
    %385 = vmatpush1.msra.mxu0 0.0
    %386 = vmatprep.subr.mxu0 0.0
    %387 = vmatpush1.msra.mxu0 0.0
    %388 = vmatprep.subr.mxu0 0.0
    %389 = vmatpush1.msra.mxu0 0.0
    %390 = vmatprep.subr.mxu0 0.0
    %391 = vmatpush1.msra.mxu0 0.0
    %392 = vmatprep.subr.mxu0 0.0
    %393 = vmatpush1.msra.mxu0 0.0
    %394 = vmatprep.subr.mxu0 0.0
    %395 = vmatpush1.msra.mxu0 0.0
    %396 = vmatprep.mubr.f32.mxu0 0.0
    %397 = vmatmul.mubr.f32.gmra.mrb[0].mxu0 %v327
    %v398 = vpop.f32.mrb[0].mxu0
    %v399 = vadd.f32 %v319, %v398
    %v400 = vpop.f32.mrb[0].mxu0
    %401 = vmatprep.mubr.f32.mxu0 0.0
    %402 = vmatmul.mubr.f32.gmra.mrb[0].mxu0 %v330
    %v403 = vpop.f32.mrb[0].mxu0
    %v404 = vadd.f32 %v324, %v403
    %v405 = vpop.f32.mrb[0].mxu0
    %406 = vdwg.mxu0
    %v407 = vmax.f32 %v399, 0.0
    %v408 = vmax.f32 %v404, 0.0
    %s409 = scalar_lea.vmem %s1, 16
    %v410 = vld [vmem:[%s409] sm:$0xff]
    %v411 = vld [vmem:[%s409 + $0x8] sm:$0xff]
    %v412 = vsel %vm28, %v407, 0.0
    %413 = vadd.xlane.f32.xlu0 %v412
    %v414 = vpop.xlane.xlu0 %413
    %v415 = vsel %vm28, %v408, 0.0
    %416 = vadd.xlane.f32.xlu0 %v415
    %v417 = vpop.xlane.xlu0 %416
    %v419 = vsel %vm28, %v407, 0
    %v422 = vsel %vm28, %v408, 0
    %424 = vmatprep.subr.mxu0 0.0
    %425 = vmatpush1.xpose.msra.mxu0 %v419
    %426 = vmatprep.subr.mxu0 0.0
    %427 = vmatpush1.xpose.msra.mxu0 %v422
    %428 = vmatprep.subr.mxu0 0.0
    %429 = vmatpush1.xpose.msra.mxu0 0.0
    %430 = vmatprep.subr.mxu0 0.0
    %431 = vmatpush1.xpose.msra.mxu0 0.0
    %432 = vmatprep.subr.mxu0 0.0
    %433 = vmatpush1.xpose.msra.mxu0 0.0
    %434 = vmatprep.subr.mxu0 0.0
    %435 = vmatpush1.xpose.msra.mxu0 0.0
    %436 = vmatprep.subr.mxu0 0.0
    %437 = vmatpush1.xpose.msra.mxu0 0.0
    %438 = vmatprep.subr.mxu0 0.0
    %439 = vmatpush1.xpose.msra.mxu0 0.0
    %440 = vmatprep.subr.mxu0 0.0
    %441 = vmatpush1.xpose.msra.mxu0 0.0
    %442 = vmatprep.subr.mxu0 0.0
    %443 = vmatpush1.xpose.msra.mxu0 0.0
    %444 = vmatprep.subr.mxu0 0.0
    %445 = vmatpush1.xpose.msra.mxu0 0.0
    %446 = vmatprep.subr.mxu0 0.0
    %447 = vmatpush1.xpose.msra.mxu0 0.0
    %448 = vmatprep.subr.mxu0 0.0
    %449 = vmatpush1.xpose.msra.mxu0 0.0
    %450 = vmatprep.subr.mxu0 0.0
    %451 = vmatpush1.xpose.msra.mxu0 0.0
    %452 = vmatprep.subr.mxu0 0.0
    %453 = vmatpush1.xpose.msra.mxu0 0.0
    %454 = vmatprep.subr.mxu0 0.0
    %455 = vmatpush1.xpose.msra.mxu0 0.0
    %456 = vmatprep.subr.mxu0 0.0
    %457 = vmatpush1.xpose.msra.mxu0 0.0
    %458 = vmatprep.subr.mxu0 0.0
    %459 = vmatpush1.xpose.msra.mxu0 0.0
    %460 = vmatprep.subr.mxu0 0.0
    %461 = vmatpush1.xpose.msra.mxu0 0.0
    %462 = vmatprep.subr.mxu0 0.0
    %463 = vmatpush1.xpose.msra.mxu0 0.0
    %464 = vmatprep.subr.mxu0 0.0
    %465 = vmatpush1.xpose.msra.mxu0 0.0
    %466 = vmatprep.subr.mxu0 0.0
    %467 = vmatpush1.xpose.msra.mxu0 0.0
    %468 = vmatprep.subr.mxu0 0.0
    %469 = vmatpush1.xpose.msra.mxu0 0.0
    %470 = vmatprep.subr.mxu0 0.0
    %471 = vmatpush1.xpose.msra.mxu0 0.0
    %472 = vmatprep.subr.mxu0 0.0
    %473 = vmatpush1.xpose.msra.mxu0 0.0
    %474 = vmatprep.subr.mxu0 0.0
    %475 = vmatpush1.xpose.msra.mxu0 0.0
    %476 = vmatprep.subr.mxu0 0.0
    %477 = vmatpush1.xpose.msra.mxu0 0.0
    %478 = vmatprep.subr.mxu0 0.0
    %479 = vmatpush1.xpose.msra.mxu0 0.0
    %480 = vmatprep.subr.mxu0 0.0
    %481 = vmatpush1.xpose.msra.mxu0 0.0
    %482 = vmatprep.subr.mxu0 0.0
    %483 = vmatpush1.xpose.msra.mxu0 0.0
    %484 = vmatprep.subr.mxu0 0.0
    %485 = vmatpush1.xpose.msra.mxu0 0.0
    %486 = vmatprep.subr.mxu0 0.0
    %487 = vmatpush1.xpose.msra.mxu0 0.0
    %488 = vmatprep.mubr.f32.mxu0 0.0
    %489 = vmatmul.mubr.f32.gmra.mrb[0].mxu0 %v419
    %v490 = vpop.f32.mrb[0].mxu0
    %v491 = vadd.f32 0.0, %v490
    %v492 = vpop.f32.mrb[0].mxu0
    %493 = vmatprep.mubr.f32.mxu0 0.0
    %494 = vmatmul.mubr.f32.gmra.mrb[0].mxu0 %v422
    %v495 = vpop.f32.mrb[0].mxu0
    %v496 = vadd.f32 0.0, %v495
    %v497 = vpop.f32.mrb[0].mxu0
    %498 = vdwg.mxu0
    %v499 = vmul.f32 %v414, 0.0625
    %v500 = vmul.f32 %v417, 0.0625
    %v502 = vsel %vm28, %v410, 0
    %v505 = vsel %vm28, %v411, 0
    %507 = vmatprep.subr.mxu0 0.0
    %508 = vmatpush1.msra.mxu0 %v499
    %509 = vmatprep.subr.mxu0 0.0
    %510 = vmatpush1.msra.mxu0 %v500
    %511 = vmatprep.subr.mxu0 0.0
    %512 = vmatpush1.msra.mxu0 0.0
    %513 = vmatprep.subr.mxu0 0.0
    %514 = vmatpush1.msra.mxu0 0.0
    %515 = vmatprep.subr.mxu0 0.0
    %516 = vmatpush1.msra.mxu0 0.0
    %517 = vmatprep.subr.mxu0 0.0
    %518 = vmatpush1.msra.mxu0 0.0
    %519 = vmatprep.subr.mxu0 0.0
    %520 = vmatpush1.msra.mxu0 0.0
    %521 = vmatprep.subr.mxu0 0.0
    %522 = vmatpush1.msra.mxu0 0.0
    %523 = vmatprep.subr.mxu0 0.0
    %524 = vmatpush1.msra.mxu0 0.0
    %525 = vmatprep.subr.mxu0 0.0
    %526 = vmatpush1.msra.mxu0 0.0
    %527 = vmatprep.subr.mxu0 0.0
    %528 = vmatpush1.msra.mxu0 0.0
    %529 = vmatprep.subr.mxu0 0.0
    %530 = vmatpush1.msra.mxu0 0.0
    %531 = vmatprep.subr.mxu0 0.0
    %532 = vmatpush1.msra.mxu0 0.0
    %533 = vmatprep.subr.mxu0 0.0
    %534 = vmatpush1.msra.mxu0 0.0
    %535 = vmatprep.subr.mxu0 0.0
    %536 = vmatpush1.msra.mxu0 0.0
    %537 = vmatprep.subr.mxu0 0.0
    %538 = vmatpush1.msra.mxu0 0.0
    %539 = vmatprep.subr.mxu0 0.0
    %540 = vmatpush1.msra.mxu0 0.0
    %541 = vmatprep.subr.mxu0 0.0
    %542 = vmatpush1.msra.mxu0 0.0
    %543 = vmatprep.subr.mxu0 0.0
    %544 = vmatpush1.msra.mxu0 0.0
    %545 = vmatprep.subr.mxu0 0.0
    %546 = vmatpush1.msra.mxu0 0.0
    %547 = vmatprep.subr.mxu0 0.0
    %548 = vmatpush1.msra.mxu0 0.0
    %549 = vmatprep.subr.mxu0 0.0
    %550 = vmatpush1.msra.mxu0 0.0
    %551 = vmatprep.subr.mxu0 0.0
    %552 = vmatpush1.msra.mxu0 0.0
    %553 = vmatprep.subr.mxu0 0.0
    %554 = vmatpush1.msra.mxu0 0.0
    %555 = vmatprep.subr.mxu0 0.0
    %556 = vmatpush1.msra.mxu0 0.0
    %557 = vmatprep.subr.mxu0 0.0
    %558 = vmatpush1.msra.mxu0 0.0
    %559 = vmatprep.subr.mxu0 0.0
    %560 = vmatpush1.msra.mxu0 0.0
    %561 = vmatprep.subr.mxu0 0.0
    %562 = vmatpush1.msra.mxu0 0.0
    %563 = vmatprep.subr.mxu0 0.0
    %564 = vmatpush1.msra.mxu0 0.0
    %565 = vmatprep.subr.mxu0 0.0
    %566 = vmatpush1.msra.mxu0 0.0
    %567 = vmatprep.subr.mxu0 0.0
    %568 = vmatpush1.msra.mxu0 0.0
    %569 = vmatprep.subr.mxu0 0.0
    %570 = vmatpush1.msra.mxu0 0.0
    %571 = vmatprep.mubr.f32.mxu0 0.0
    %572 = vmatmul.mubr.f32.gmra.mrb[0].mxu0 %v502
    %v573 = vpop.f32.mrb[0].mxu0
    %v574 = vadd.f32 0.0, %v573
    %v575 = vpop.f32.mrb[0].mxu0
    %576 = vmatprep.mubr.f32.mxu0 0.0
    %577 = vmatmul.mubr.f32.gmra.mrb[0].mxu0 %v505
    %v578 = vpop.f32.mrb[0].mxu0
    %v579 = vadd.f32 0.0, %v578
    %v580 = vpop.f32.mrb[0].mxu0
    %581 = vdwg.mxu0
    %582 = vmatprep.subr.mxu0 0.0
    %583 = vmatpush1.msra.mxu0 %v491
    %584 = vmatprep.subr.mxu0 0.0
    %585 = vmatpush1.msra.mxu0 %v496
    %586 = vmatprep.subr.mxu0 0.0
    %587 = vmatpush1.msra.mxu0 0.0
    %588 = vmatprep.subr.mxu0 0.0
    %589 = vmatpush1.msra.mxu0 0.0
    %590 = vmatprep.subr.mxu0 0.0
    %591 = vmatpush1.msra.mxu0 0.0
    %592 = vmatprep.subr.mxu0 0.0
    %593 = vmatpush1.msra.mxu0 0.0
    %594 = vmatprep.subr.mxu0 0.0
    %595 = vmatpush1.msra.mxu0 0.0
    %596 = vmatprep.subr.mxu0 0.0
    %597 = vmatpush1.msra.mxu0 0.0
    %598 = vmatprep.subr.mxu0 0.0
    %599 = vmatpush1.msra.mxu0 0.0
    %600 = vmatprep.subr.mxu0 0.0
    %601 = vmatpush1.msra.mxu0 0.0
    %602 = vmatprep.subr.mxu0 0.0
    %603 = vmatpush1.msra.mxu0 0.0
    %604 = vmatprep.subr.mxu0 0.0
    %605 = vmatpush1.msra.mxu0 0.0
    %606 = vmatprep.subr.mxu0 0.0
    %607 = vmatpush1.msra.mxu0 0.0
    %608 = vmatprep.subr.mxu0 0.0
    %609 = vmatpush1.msra.mxu0 0.0
    %610 = vmatprep.subr.mxu0 0.0
    %611 = vmatpush1.msra.mxu0 0.0
    %612 = vmatprep.subr.mxu0 0.0
    %613 = vmatpush1.msra.mxu0 0.0
    %614 = vmatprep.subr.mxu0 0.0
    %615 = vmatpush1.msra.mxu0 0.0
    %616 = vmatprep.subr.mxu0 0.0
    %617 = vmatpush1.msra.mxu0 0.0
    %618 = vmatprep.subr.mxu0 0.0
    %619 = vmatpush1.msra.mxu0 0.0
    %620 = vmatprep.subr.mxu0 0.0
    %621 = vmatpush1.msra.mxu0 0.0
    %622 = vmatprep.subr.mxu0 0.0
    %623 = vmatpush1.msra.mxu0 0.0
    %624 = vmatprep.subr.mxu0 0.0
    %625 = vmatpush1.msra.mxu0 0.0
    %626 = vmatprep.subr.mxu0 0.0
    %627 = vmatpush1.msra.mxu0 0.0
    %628 = vmatprep.subr.mxu0 0.0
    %629 = vmatpush1.msra.mxu0 0.0
    %630 = vmatprep.subr.mxu0 0.0
    %631 = vmatpush1.msra.mxu0 0.0
    %632 = vmatprep.subr.mxu0 0.0
    %633 = vmatpush1.msra.mxu0 0.0
    %634 = vmatprep.subr.mxu0 0.0
    %635 = vmatpush1.msra.mxu0 0.0
    %636 = vmatprep.subr.mxu0 0.0
    %637 = vmatpush1.msra.mxu0 0.0
    %638 = vmatprep.subr.mxu0 0.0
    %639 = vmatpush1.msra.mxu0 0.0
    %640 = vmatprep.subr.mxu0 0.0
    %641 = vmatpush1.msra.mxu0 0.0
    %642 = vmatprep.subr.mxu0 0.0
    %643 = vmatpush1.msra.mxu0 0.0
    %644 = vmatprep.subr.mxu0 0.0
    %645 = vmatpush1.msra.mxu0 0.0
    %646 = vmatprep.mubr.f32.mxu0 0.0
    %647 = vmatmul.mubr.f32.gmra.mrb[0].mxu0 %v502
    %v648 = vpop.f32.mrb[0].mxu0
    %v649 = vadd.f32 0.0, %v648
    %v650 = vpop.f32.mrb[0].mxu0
    %651 = vmatprep.mubr.f32.mxu0 0.0
    %652 = vmatmul.mubr.f32.gmra.mrb[0].mxu0 %v505
    %v653 = vpop.f32.mrb[0].mxu0
    %v654 = vadd.f32 0.0, %v653
    %v655 = vpop.f32.mrb[0].mxu0
    %656 = vdwg.mxu0
    %v657 = vmul.f32 %v649, 0.0625
    %v658 = vmul.f32 %v654, 0.0625
    %v659 = vmul.f32 %v657, %v410
    %v660 = vmul.f32 %v658, %v411
    %v661 = vsel %vm28, %v659, 0.0
    %662 = vadd.xlane.f32.xlu0 %v661
    %v663 = vpop.xlane.xlu0 %662
    %v664 = vsel %vm28, %v660, 0.0
    %665 = vadd.xlane.f32.xlu0 %v664
    %v666 = vpop.xlane.xlu0 %665
    %v667 = vmul.f32 %v574, %v574
    %v668 = vmul.f32 %v579, %v579
    %v669 = vsub.f32 %v663, %v667
    %v670 = vsub.f32 %v666, %v668
    %v671 = vmax.f32 %v669, 0.0
    %v672 = vmax.f32 %v670, 0.0
    %s673 = scalar_lea.vmem %s2, 16
    %v674 = vld [vmem:[%s673] sm:$0xff]
    %v675 = vld [vmem:[%s673 + $0x8] sm:$0xff]
    %v676 = vadd.f32 %v671, 1e-05
    %v677 = vadd.f32 %v672, 1e-05
    %v678 = vrsqrt.pop %v676
    %v679 = vrsqrt.pop %v677
    %v680 = vmul.f32 %v674, %v678
    %v681 = vmul.f32 %v675, %v679
    %s682 = scalar_lea.vmem %s3, 16
    %v683 = vld [vmem:[%s682] sm:$0xff]
    %v684 = vld [vmem:[%s682 + $0x8] sm:$0xff]
    %v685 = vmul.f32 %v574, %v680
    %v686 = vmul.f32 %v579, %v681
    %v687 = vsub.f32 %v683, %v685
    %v688 = vsub.f32 %v684, %v686
    %690 = vset.pattern.permute.xlu0 0
    %691 = vperm.xlu0 %690, %v680
    %v692 = vpop.permute.xlu0 %691
    %695 = vset.pattern.permute.xlu0 0
    %696 = vperm.xlu0 %695, %v681
    %v697 = vpop.permute.xlu0 %696
    %v699 = vmul.f32 %v692, %v410
    %v700 = vmul.f32 %v697, %v411
    %702 = vset.pattern.permute.xlu0 0
    %703 = vperm.xlu0 %702, %v687
    %v704 = vpop.permute.xlu0 %703
    %707 = vset.pattern.permute.xlu0 0
    %708 = vperm.xlu0 %707, %v688
    %v709 = vpop.permute.xlu0 %708
    %v712 = vsel %vm28, %v699, 0
    %v715 = vsel %vm28, %v700, 0
    %717 = vmatprep.subr.mxu0 0.0
    %718 = vmatpush1.msra.mxu0 %v407
    %719 = vmatprep.subr.mxu0 0.0
    %720 = vmatpush1.msra.mxu0 %v408
    %721 = vmatprep.subr.mxu0 0.0
    %722 = vmatpush1.msra.mxu0 0.0
    %723 = vmatprep.subr.mxu0 0.0
    %724 = vmatpush1.msra.mxu0 0.0
    %725 = vmatprep.subr.mxu0 0.0
    %726 = vmatpush1.msra.mxu0 0.0
    %727 = vmatprep.subr.mxu0 0.0
    %728 = vmatpush1.msra.mxu0 0.0
    %729 = vmatprep.subr.mxu0 0.0
    %730 = vmatpush1.msra.mxu0 0.0
    %731 = vmatprep.subr.mxu0 0.0
    %732 = vmatpush1.msra.mxu0 0.0
    %733 = vmatprep.subr.mxu0 0.0
    %734 = vmatpush1.msra.mxu0 0.0
    %735 = vmatprep.subr.mxu0 0.0
    %736 = vmatpush1.msra.mxu0 0.0
    %737 = vmatprep.subr.mxu0 0.0
    %738 = vmatpush1.msra.mxu0 0.0
    %739 = vmatprep.subr.mxu0 0.0
    %740 = vmatpush1.msra.mxu0 0.0
    %741 = vmatprep.subr.mxu0 0.0
    %742 = vmatpush1.msra.mxu0 0.0
    %743 = vmatprep.subr.mxu0 0.0
    %744 = vmatpush1.msra.mxu0 0.0
    %745 = vmatprep.subr.mxu0 0.0
    %746 = vmatpush1.msra.mxu0 0.0
    %747 = vmatprep.subr.mxu0 0.0
    %748 = vmatpush1.msra.mxu0 0.0
    %749 = vmatprep.subr.mxu0 0.0
    %750 = vmatpush1.msra.mxu0 0.0
    %751 = vmatprep.subr.mxu0 0.0
    %752 = vmatpush1.msra.mxu0 0.0
    %753 = vmatprep.subr.mxu0 0.0
    %754 = vmatpush1.msra.mxu0 0.0
    %755 = vmatprep.subr.mxu0 0.0
    %756 = vmatpush1.msra.mxu0 0.0
    %757 = vmatprep.subr.mxu0 0.0
    %758 = vmatpush1.msra.mxu0 0.0
    %759 = vmatprep.subr.mxu0 0.0
    %760 = vmatpush1.msra.mxu0 0.0
    %761 = vmatprep.subr.mxu0 0.0
    %762 = vmatpush1.msra.mxu0 0.0
    %763 = vmatprep.subr.mxu0 0.0
    %764 = vmatpush1.msra.mxu0 0.0
    %765 = vmatprep.subr.mxu0 0.0
    %766 = vmatpush1.msra.mxu0 0.0
    %767 = vmatprep.subr.mxu0 0.0
    %768 = vmatpush1.msra.mxu0 0.0
    %769 = vmatprep.subr.mxu0 0.0
    %770 = vmatpush1.msra.mxu0 0.0
    %771 = vmatprep.subr.mxu0 0.0
    %772 = vmatpush1.msra.mxu0 0.0
    %773 = vmatprep.subr.mxu0 0.0
    %774 = vmatpush1.msra.mxu0 0.0
    %775 = vmatprep.subr.mxu0 0.0
    %776 = vmatpush1.msra.mxu0 0.0
    %777 = vmatprep.subr.mxu0 0.0
    %778 = vmatpush1.msra.mxu0 0.0
    %779 = vmatprep.subr.mxu0 0.0
    %780 = vmatpush1.msra.mxu0 0.0
    %781 = vmatprep.mubr.f32.mxu0 0.0
    %782 = vmatmul.mubr.f32.gmra.mrb[0].mxu0 %v712
    %v783 = vpop.f32.mrb[0].mxu0
    %v784 = vadd.f32 %v704, %v783
    %v785 = vpop.f32.mrb[0].mxu0
    %786 = vmatprep.mubr.f32.mxu0 0.0
    %787 = vmatmul.mubr.f32.gmra.mrb[0].mxu0 %v715
    %v788 = vpop.f32.mrb[0].mxu0
    %v789 = vadd.f32 %v709, %v788
    %v790 = vpop.f32.mrb[0].mxu0
    %791 = vdwg.mxu0
    %v792 = vmax.f32 %v784, 0.0
    %v793 = vmax.f32 %v789, 0.0
    %s794 = scalar_lea.vmem %s1, 32
    %v795 = vld [vmem:[%s794] sm:$0xff]
    %v796 = vld [vmem:[%s794 + $0x8] sm:$0xff]
    %v797 = vsel %vm28, %v792, 0.0
    %798 = vadd.xlane.f32.xlu0 %v797
    %v799 = vpop.xlane.xlu0 %798
    %v800 = vsel %vm28, %v793, 0.0
    %801 = vadd.xlane.f32.xlu0 %v800
    %v802 = vpop.xlane.xlu0 %801
    %v804 = vsel %vm28, %v792, 0
    %v807 = vsel %vm28, %v793, 0
    %809 = vmatprep.subr.mxu0 0.0
    %810 = vmatpush1.xpose.msra.mxu0 %v804
    %811 = vmatprep.subr.mxu0 0.0
    %812 = vmatpush1.xpose.msra.mxu0 %v807
    %813 = vmatprep.subr.mxu0 0.0
    %814 = vmatpush1.xpose.msra.mxu0 0.0
    %815 = vmatprep.subr.mxu0 0.0
    %816 = vmatpush1.xpose.msra.mxu0 0.0
    %817 = vmatprep.subr.mxu0 0.0
    %818 = vmatpush1.xpose.msra.mxu0 0.0
    %819 = vmatprep.subr.mxu0 0.0
    %820 = vmatpush1.xpose.msra.mxu0 0.0
    %821 = vmatprep.subr.mxu0 0.0
    %822 = vmatpush1.xpose.msra.mxu0 0.0
    %823 = vmatprep.subr.mxu0 0.0
    %824 = vmatpush1.xpose.msra.mxu0 0.0
    %825 = vmatprep.subr.mxu0 0.0
    %826 = vmatpush1.xpose.msra.mxu0 0.0
    %827 = vmatprep.subr.mxu0 0.0
    %828 = vmatpush1.xpose.msra.mxu0 0.0
    %829 = vmatprep.subr.mxu0 0.0
    %830 = vmatpush1.xpose.msra.mxu0 0.0
    %831 = vmatprep.subr.mxu0 0.0
    %832 = vmatpush1.xpose.msra.mxu0 0.0
    %833 = vmatprep.subr.mxu0 0.0
    %834 = vmatpush1.xpose.msra.mxu0 0.0
    %835 = vmatprep.subr.mxu0 0.0
    %836 = vmatpush1.xpose.msra.mxu0 0.0
    %837 = vmatprep.subr.mxu0 0.0
    %838 = vmatpush1.xpose.msra.mxu0 0.0
    %839 = vmatprep.subr.mxu0 0.0
    %840 = vmatpush1.xpose.msra.mxu0 0.0
    %841 = vmatprep.subr.mxu0 0.0
    %842 = vmatpush1.xpose.msra.mxu0 0.0
    %843 = vmatprep.subr.mxu0 0.0
    %844 = vmatpush1.xpose.msra.mxu0 0.0
    %845 = vmatprep.subr.mxu0 0.0
    %846 = vmatpush1.xpose.msra.mxu0 0.0
    %847 = vmatprep.subr.mxu0 0.0
    %848 = vmatpush1.xpose.msra.mxu0 0.0
    %849 = vmatprep.subr.mxu0 0.0
    %850 = vmatpush1.xpose.msra.mxu0 0.0
    %851 = vmatprep.subr.mxu0 0.0
    %852 = vmatpush1.xpose.msra.mxu0 0.0
    %853 = vmatprep.subr.mxu0 0.0
    %854 = vmatpush1.xpose.msra.mxu0 0.0
    %855 = vmatprep.subr.mxu0 0.0
    %856 = vmatpush1.xpose.msra.mxu0 0.0
    %857 = vmatprep.subr.mxu0 0.0
    %858 = vmatpush1.xpose.msra.mxu0 0.0
    %859 = vmatprep.subr.mxu0 0.0
    %860 = vmatpush1.xpose.msra.mxu0 0.0
    %861 = vmatprep.subr.mxu0 0.0
    %862 = vmatpush1.xpose.msra.mxu0 0.0
    %863 = vmatprep.subr.mxu0 0.0
    %864 = vmatpush1.xpose.msra.mxu0 0.0
    %865 = vmatprep.subr.mxu0 0.0
    %866 = vmatpush1.xpose.msra.mxu0 0.0
    %867 = vmatprep.subr.mxu0 0.0
    %868 = vmatpush1.xpose.msra.mxu0 0.0
    %869 = vmatprep.subr.mxu0 0.0
    %870 = vmatpush1.xpose.msra.mxu0 0.0
    %871 = vmatprep.subr.mxu0 0.0
    %872 = vmatpush1.xpose.msra.mxu0 0.0
    %873 = vmatprep.mubr.f32.mxu0 0.0
    %874 = vmatmul.mubr.f32.gmra.mrb[0].mxu0 %v804
    %v875 = vpop.f32.mrb[0].mxu0
    %v876 = vadd.f32 0.0, %v875
    %v877 = vpop.f32.mrb[0].mxu0
    %878 = vmatprep.mubr.f32.mxu0 0.0
    %879 = vmatmul.mubr.f32.gmra.mrb[0].mxu0 %v807
    %v880 = vpop.f32.mrb[0].mxu0
    %v881 = vadd.f32 0.0, %v880
    %v882 = vpop.f32.mrb[0].mxu0
    %883 = vdwg.mxu0
    %v884 = vmul.f32 %v799, 0.0625
    %v885 = vmul.f32 %v802, 0.0625
    %v887 = vsel %vm28, %v795, 0
    %v890 = vsel %vm28, %v796, 0
    %892 = vmatprep.subr.mxu0 0.0
    %893 = vmatpush1.msra.mxu0 %v884
    %894 = vmatprep.subr.mxu0 0.0
    %895 = vmatpush1.msra.mxu0 %v885
    %896 = vmatprep.subr.mxu0 0.0
    %897 = vmatpush1.msra.mxu0 0.0
    %898 = vmatprep.subr.mxu0 0.0
    %899 = vmatpush1.msra.mxu0 0.0
    %900 = vmatprep.subr.mxu0 0.0
    %901 = vmatpush1.msra.mxu0 0.0
    %902 = vmatprep.subr.mxu0 0.0
    %903 = vmatpush1.msra.mxu0 0.0
    %904 = vmatprep.subr.mxu0 0.0
    %905 = vmatpush1.msra.mxu0 0.0
    %906 = vmatprep.subr.mxu0 0.0
    %907 = vmatpush1.msra.mxu0 0.0
    %908 = vmatprep.subr.mxu0 0.0
    %909 = vmatpush1.msra.mxu0 0.0
    %910 = vmatprep.subr.mxu0 0.0
    %911 = vmatpush1.msra.mxu0 0.0
    %912 = vmatprep.subr.mxu0 0.0
    %913 = vmatpush1.msra.mxu0 0.0
    %914 = vmatprep.subr.mxu0 0.0
    %915 = vmatpush1.msra.mxu0 0.0
    %916 = vmatprep.subr.mxu0 0.0
    %917 = vmatpush1.msra.mxu0 0.0
    %918 = vmatprep.subr.mxu0 0.0
    %919 = vmatpush1.msra.mxu0 0.0
    %920 = vmatprep.subr.mxu0 0.0
    %921 = vmatpush1.msra.mxu0 0.0
    %922 = vmatprep.subr.mxu0 0.0
    %923 = vmatpush1.msra.mxu0 0.0
    %924 = vmatprep.subr.mxu0 0.0
    %925 = vmatpush1.msra.mxu0 0.0
    %926 = vmatprep.subr.mxu0 0.0
    %927 = vmatpush1.msra.mxu0 0.0
    %928 = vmatprep.subr.mxu0 0.0
    %929 = vmatpush1.msra.mxu0 0.0
    %930 = vmatprep.subr.mxu0 0.0
    %931 = vmatpush1.msra.mxu0 0.0
    %932 = vmatprep.subr.mxu0 0.0
    %933 = vmatpush1.msra.mxu0 0.0
    %934 = vmatprep.subr.mxu0 0.0
    %935 = vmatpush1.msra.mxu0 0.0
    %936 = vmatprep.subr.mxu0 0.0
    %937 = vmatpush1.msra.mxu0 0.0
    %938 = vmatprep.subr.mxu0 0.0
    %939 = vmatpush1.msra.mxu0 0.0
    %940 = vmatprep.subr.mxu0 0.0
    %941 = vmatpush1.msra.mxu0 0.0
    %942 = vmatprep.subr.mxu0 0.0
    %943 = vmatpush1.msra.mxu0 0.0
    %944 = vmatprep.subr.mxu0 0.0
    %945 = vmatpush1.msra.mxu0 0.0
    %946 = vmatprep.subr.mxu0 0.0
    %947 = vmatpush1.msra.mxu0 0.0
    %948 = vmatprep.subr.mxu0 0.0
    %949 = vmatpush1.msra.mxu0 0.0
    %950 = vmatprep.subr.mxu0 0.0
    %951 = vmatpush1.msra.mxu0 0.0
    %952 = vmatprep.subr.mxu0 0.0
    %953 = vmatpush1.msra.mxu0 0.0
    %954 = vmatprep.subr.mxu0 0.0
    %955 = vmatpush1.msra.mxu0 0.0
    %956 = vmatprep.mubr.f32.mxu0 0.0
    %957 = vmatmul.mubr.f32.gmra.mrb[0].mxu0 %v887
    %v958 = vpop.f32.mrb[0].mxu0
    %v959 = vadd.f32 0.0, %v958
    %v960 = vpop.f32.mrb[0].mxu0
    %961 = vmatprep.mubr.f32.mxu0 0.0
    %962 = vmatmul.mubr.f32.gmra.mrb[0].mxu0 %v890
    %v963 = vpop.f32.mrb[0].mxu0
    %v964 = vadd.f32 0.0, %v963
    %v965 = vpop.f32.mrb[0].mxu0
    %966 = vdwg.mxu0
    %967 = vmatprep.subr.mxu0 0.0
    %968 = vmatpush1.msra.mxu0 %v876
    %969 = vmatprep.subr.mxu0 0.0
    %970 = vmatpush1.msra.mxu0 %v881
    %971 = vmatprep.subr.mxu0 0.0
    %972 = vmatpush1.msra.mxu0 0.0
    %973 = vmatprep.subr.mxu0 0.0
    %974 = vmatpush1.msra.mxu0 0.0
    %975 = vmatprep.subr.mxu0 0.0
    %976 = vmatpush1.msra.mxu0 0.0
    %977 = vmatprep.subr.mxu0 0.0
    %978 = vmatpush1.msra.mxu0 0.0
    %979 = vmatprep.subr.mxu0 0.0
    %980 = vmatpush1.msra.mxu0 0.0
    %981 = vmatprep.subr.mxu0 0.0
    %982 = vmatpush1.msra.mxu0 0.0
    %983 = vmatprep.subr.mxu0 0.0
    %984 = vmatpush1.msra.mxu0 0.0
    %985 = vmatprep.subr.mxu0 0.0
    %986 = vmatpush1.msra.mxu0 0.0
    %987 = vmatprep.subr.mxu0 0.0
    %988 = vmatpush1.msra.mxu0 0.0
    %989 = vmatprep.subr.mxu0 0.0
    %990 = vmatpush1.msra.mxu0 0.0
    %991 = vmatprep.subr.mxu0 0.0
    %992 = vmatpush1.msra.mxu0 0.0
    %993 = vmatprep.subr.mxu0 0.0
    %994 = vmatpush1.msra.mxu0 0.0
    %995 = vmatprep.subr.mxu0 0.0
    %996 = vmatpush1.msra.mxu0 0.0
    %997 = vmatprep.subr.mxu0 0.0
    %998 = vmatpush1.msra.mxu0 0.0
    %999 = vmatprep.subr.mxu0 0.0
    %1000 = vmatpush1.msra.mxu0 0.0
    %1001 = vmatprep.subr.mxu0 0.0
    %1002 = vmatpush1.msra.mxu0 0.0
    %1003 = vmatprep.subr.mxu0 0.0
    %1004 = vmatpush1.msra.mxu0 0.0
    %1005 = vmatprep.subr.mxu0 0.0
    %1006 = vmatpush1.msra.mxu0 0.0
    %1007 = vmatprep.subr.mxu0 0.0
    %1008 = vmatpush1.msra.mxu0 0.0
    %1009 = vmatprep.subr.mxu0 0.0
    %1010 = vmatpush1.msra.mxu0 0.0
    %1011 = vmatprep.subr.mxu0 0.0
    %1012 = vmatpush1.msra.mxu0 0.0
    %1013 = vmatprep.subr.mxu0 0.0
    %1014 = vmatpush1.msra.mxu0 0.0
    %1015 = vmatprep.subr.mxu0 0.0
    %1016 = vmatpush1.msra.mxu0 0.0
    %1017 = vmatprep.subr.mxu0 0.0
    %1018 = vmatpush1.msra.mxu0 0.0
    %1019 = vmatprep.subr.mxu0 0.0
    %1020 = vmatpush1.msra.mxu0 0.0
    %1021 = vmatprep.subr.mxu0 0.0
    %1022 = vmatpush1.msra.mxu0 0.0
    %1023 = vmatprep.subr.mxu0 0.0
    %1024 = vmatpush1.msra.mxu0 0.0
    %1025 = vmatprep.subr.mxu0 0.0
    %1026 = vmatpush1.msra.mxu0 0.0
    %1027 = vmatprep.subr.mxu0 0.0
    %1028 = vmatpush1.msra.mxu0 0.0
    %1029 = vmatprep.subr.mxu0 0.0
    %1030 = vmatpush1.msra.mxu0 0.0
    %1031 = vmatprep.mubr.f32.mxu0 0.0
    %1032 = vmatmul.mubr.f32.gmra.mrb[0].mxu0 %v887
    %v1033 = vpop.f32.mrb[0].mxu0
    %v1034 = vadd.f32 0.0, %v1033
    %v1035 = vpop.f32.mrb[0].mxu0
    %1036 = vmatprep.mubr.f32.mxu0 0.0
    %1037 = vmatmul.mubr.f32.gmra.mrb[0].mxu0 %v890
    %v1038 = vpop.f32.mrb[0].mxu0
    %v1039 = vadd.f32 0.0, %v1038
    %v1040 = vpop.f32.mrb[0].mxu0
    %1041 = vdwg.mxu0
    %v1042 = vmul.f32 %v1034, 0.0625
    %v1043 = vmul.f32 %v1039, 0.0625
    %v1044 = vmul.f32 %v1042, %v795
    %v1045 = vmul.f32 %v1043, %v796
    %v1046 = vsel %vm28, %v1044, 0.0
    %1047 = vadd.xlane.f32.xlu0 %v1046
    %v1048 = vpop.xlane.xlu0 %1047
    %v1049 = vsel %vm28, %v1045, 0.0
    %1050 = vadd.xlane.f32.xlu0 %v1049
    %v1051 = vpop.xlane.xlu0 %1050
    %v1052 = vmul.f32 %v959, %v959
    %v1053 = vmul.f32 %v964, %v964
    %v1054 = vsub.f32 %v1048, %v1052
    %v1055 = vsub.f32 %v1051, %v1053
    %v1056 = vmax.f32 %v1054, 0.0
    %v1057 = vmax.f32 %v1055, 0.0
    %s1058 = scalar_lea.vmem %s2, 32
    %v1059 = vld [vmem:[%s1058] sm:$0xff]
    %v1060 = vld [vmem:[%s1058 + $0x8] sm:$0xff]
    %v1061 = vadd.f32 %v1056, 1e-05
    %v1062 = vadd.f32 %v1057, 1e-05
    %v1063 = vrsqrt.pop %v1061
    %v1064 = vrsqrt.pop %v1062
    %v1065 = vmul.f32 %v1059, %v1063
    %v1066 = vmul.f32 %v1060, %v1064
    %s1067 = scalar_lea.vmem %s3, 32
    %v1068 = vld [vmem:[%s1067] sm:$0xff]
    %v1069 = vld [vmem:[%s1067 + $0x8] sm:$0xff]
    %v1070 = vmul.f32 %v959, %v1065
    %v1071 = vmul.f32 %v964, %v1066
    %v1072 = vsub.f32 %v1068, %v1070
    %v1073 = vsub.f32 %v1069, %v1071
    %1075 = vset.pattern.permute.xlu0 0
    %1076 = vperm.xlu0 %1075, %v1065
    %v1077 = vpop.permute.xlu0 %1076
    %1080 = vset.pattern.permute.xlu0 0
    %1081 = vperm.xlu0 %1080, %v1066
    %v1082 = vpop.permute.xlu0 %1081
    %v1084 = vmul.f32 %v1077, %v795
    %v1085 = vmul.f32 %v1082, %v796
    %1087 = vset.pattern.permute.xlu0 0
    %1088 = vperm.xlu0 %1087, %v1072
    %v1089 = vpop.permute.xlu0 %1088
    %1092 = vset.pattern.permute.xlu0 0
    %1093 = vperm.xlu0 %1092, %v1073
    %v1094 = vpop.permute.xlu0 %1093
    %v1097 = vsel %vm28, %v1084, 0
    %v1100 = vsel %vm28, %v1085, 0
    %1102 = vmatprep.subr.mxu0 0.0
    %1103 = vmatpush1.msra.mxu0 %v792
    %1104 = vmatprep.subr.mxu0 0.0
    %1105 = vmatpush1.msra.mxu0 %v793
    %1106 = vmatprep.subr.mxu0 0.0
    %1107 = vmatpush1.msra.mxu0 0.0
    %1108 = vmatprep.subr.mxu0 0.0
    %1109 = vmatpush1.msra.mxu0 0.0
    %1110 = vmatprep.subr.mxu0 0.0
    %1111 = vmatpush1.msra.mxu0 0.0
    %1112 = vmatprep.subr.mxu0 0.0
    %1113 = vmatpush1.msra.mxu0 0.0
    %1114 = vmatprep.subr.mxu0 0.0
    %1115 = vmatpush1.msra.mxu0 0.0
    %1116 = vmatprep.subr.mxu0 0.0
    %1117 = vmatpush1.msra.mxu0 0.0
    %1118 = vmatprep.subr.mxu0 0.0
    %1119 = vmatpush1.msra.mxu0 0.0
    %1120 = vmatprep.subr.mxu0 0.0
    %1121 = vmatpush1.msra.mxu0 0.0
    %1122 = vmatprep.subr.mxu0 0.0
    %1123 = vmatpush1.msra.mxu0 0.0
    %1124 = vmatprep.subr.mxu0 0.0
    %1125 = vmatpush1.msra.mxu0 0.0
    %1126 = vmatprep.subr.mxu0 0.0
    %1127 = vmatpush1.msra.mxu0 0.0
    %1128 = vmatprep.subr.mxu0 0.0
    %1129 = vmatpush1.msra.mxu0 0.0
    %1130 = vmatprep.subr.mxu0 0.0
    %1131 = vmatpush1.msra.mxu0 0.0
    %1132 = vmatprep.subr.mxu0 0.0
    %1133 = vmatpush1.msra.mxu0 0.0
    %1134 = vmatprep.subr.mxu0 0.0
    %1135 = vmatpush1.msra.mxu0 0.0
    %1136 = vmatprep.subr.mxu0 0.0
    %1137 = vmatpush1.msra.mxu0 0.0
    %1138 = vmatprep.subr.mxu0 0.0
    %1139 = vmatpush1.msra.mxu0 0.0
    %1140 = vmatprep.subr.mxu0 0.0
    %1141 = vmatpush1.msra.mxu0 0.0
    %1142 = vmatprep.subr.mxu0 0.0
    %1143 = vmatpush1.msra.mxu0 0.0
    %1144 = vmatprep.subr.mxu0 0.0
    %1145 = vmatpush1.msra.mxu0 0.0
    %1146 = vmatprep.subr.mxu0 0.0
    %1147 = vmatpush1.msra.mxu0 0.0
    %1148 = vmatprep.subr.mxu0 0.0
    %1149 = vmatpush1.msra.mxu0 0.0
    %1150 = vmatprep.subr.mxu0 0.0
    %1151 = vmatpush1.msra.mxu0 0.0
    %1152 = vmatprep.subr.mxu0 0.0
    %1153 = vmatpush1.msra.mxu0 0.0
    %1154 = vmatprep.subr.mxu0 0.0
    %1155 = vmatpush1.msra.mxu0 0.0
    %1156 = vmatprep.subr.mxu0 0.0
    %1157 = vmatpush1.msra.mxu0 0.0
    %1158 = vmatprep.subr.mxu0 0.0
    %1159 = vmatpush1.msra.mxu0 0.0
    %1160 = vmatprep.subr.mxu0 0.0
    %1161 = vmatpush1.msra.mxu0 0.0
    %1162 = vmatprep.subr.mxu0 0.0
    %1163 = vmatpush1.msra.mxu0 0.0
    %1164 = vmatprep.subr.mxu0 0.0
    %1165 = vmatpush1.msra.mxu0 0.0
    %1166 = vmatprep.mubr.f32.mxu0 0.0
    %1167 = vmatmul.mubr.f32.gmra.mrb[0].mxu0 %v1097
    %v1168 = vpop.f32.mrb[0].mxu0
    %v1169 = vadd.f32 %v1089, %v1168
    %v1170 = vpop.f32.mrb[0].mxu0
    %1171 = vmatprep.mubr.f32.mxu0 0.0
    %1172 = vmatmul.mubr.f32.gmra.mrb[0].mxu0 %v1100
    %v1173 = vpop.f32.mrb[0].mxu0
    %v1174 = vadd.f32 %v1094, %v1173
    %v1175 = vpop.f32.mrb[0].mxu0
    %1176 = vdwg.mxu0
    %v1177 = vmax.f32 %v1169, 0.0
    %v1178 = vmax.f32 %v1174, 0.0
    %s1179 = scalar_lea.vmem %s1, 48
    %v1180 = vld [vmem:[%s1179] sm:$0xff]
    %v1181 = vld [vmem:[%s1179 + $0x8] sm:$0xff]
    %v1182 = vsel %vm28, %v1177, 0.0
    %1183 = vadd.xlane.f32.xlu0 %v1182
    %v1184 = vpop.xlane.xlu0 %1183
    %v1185 = vsel %vm28, %v1178, 0.0
    %1186 = vadd.xlane.f32.xlu0 %v1185
    %v1187 = vpop.xlane.xlu0 %1186
    %v1189 = vsel %vm28, %v1177, 0
    %v1192 = vsel %vm28, %v1178, 0
    %1194 = vmatprep.subr.mxu0 0.0
    %1195 = vmatpush1.xpose.msra.mxu0 %v1189
    %1196 = vmatprep.subr.mxu0 0.0
    %1197 = vmatpush1.xpose.msra.mxu0 %v1192
    %1198 = vmatprep.subr.mxu0 0.0
    %1199 = vmatpush1.xpose.msra.mxu0 0.0
    %1200 = vmatprep.subr.mxu0 0.0
    %1201 = vmatpush1.xpose.msra.mxu0 0.0
    %1202 = vmatprep.subr.mxu0 0.0
    %1203 = vmatpush1.xpose.msra.mxu0 0.0
    %1204 = vmatprep.subr.mxu0 0.0
    %1205 = vmatpush1.xpose.msra.mxu0 0.0
    %1206 = vmatprep.subr.mxu0 0.0
    %1207 = vmatpush1.xpose.msra.mxu0 0.0
    %1208 = vmatprep.subr.mxu0 0.0
    %1209 = vmatpush1.xpose.msra.mxu0 0.0
    %1210 = vmatprep.subr.mxu0 0.0
    %1211 = vmatpush1.xpose.msra.mxu0 0.0
    %1212 = vmatprep.subr.mxu0 0.0
    %1213 = vmatpush1.xpose.msra.mxu0 0.0
    %1214 = vmatprep.subr.mxu0 0.0
    %1215 = vmatpush1.xpose.msra.mxu0 0.0
    %1216 = vmatprep.subr.mxu0 0.0
    %1217 = vmatpush1.xpose.msra.mxu0 0.0
    %1218 = vmatprep.subr.mxu0 0.0
    %1219 = vmatpush1.xpose.msra.mxu0 0.0
    %1220 = vmatprep.subr.mxu0 0.0
    %1221 = vmatpush1.xpose.msra.mxu0 0.0
    %1222 = vmatprep.subr.mxu0 0.0
    %1223 = vmatpush1.xpose.msra.mxu0 0.0
    %1224 = vmatprep.subr.mxu0 0.0
    %1225 = vmatpush1.xpose.msra.mxu0 0.0
    %1226 = vmatprep.subr.mxu0 0.0
    %1227 = vmatpush1.xpose.msra.mxu0 0.0
    %1228 = vmatprep.subr.mxu0 0.0
    %1229 = vmatpush1.xpose.msra.mxu0 0.0
    %1230 = vmatprep.subr.mxu0 0.0
    %1231 = vmatpush1.xpose.msra.mxu0 0.0
    %1232 = vmatprep.subr.mxu0 0.0
    %1233 = vmatpush1.xpose.msra.mxu0 0.0
    %1234 = vmatprep.subr.mxu0 0.0
    %1235 = vmatpush1.xpose.msra.mxu0 0.0
    %1236 = vmatprep.subr.mxu0 0.0
    %1237 = vmatpush1.xpose.msra.mxu0 0.0
    %1238 = vmatprep.subr.mxu0 0.0
    %1239 = vmatpush1.xpose.msra.mxu0 0.0
    %1240 = vmatprep.subr.mxu0 0.0
    %1241 = vmatpush1.xpose.msra.mxu0 0.0
    %1242 = vmatprep.subr.mxu0 0.0
    %1243 = vmatpush1.xpose.msra.mxu0 0.0
    %1244 = vmatprep.subr.mxu0 0.0
    %1245 = vmatpush1.xpose.msra.mxu0 0.0
    %1246 = vmatprep.subr.mxu0 0.0
    %1247 = vmatpush1.xpose.msra.mxu0 0.0
    %1248 = vmatprep.subr.mxu0 0.0
    %1249 = vmatpush1.xpose.msra.mxu0 0.0
    %1250 = vmatprep.subr.mxu0 0.0
    %1251 = vmatpush1.xpose.msra.mxu0 0.0
    %1252 = vmatprep.subr.mxu0 0.0
    %1253 = vmatpush1.xpose.msra.mxu0 0.0
    %1254 = vmatprep.subr.mxu0 0.0
    %1255 = vmatpush1.xpose.msra.mxu0 0.0
    %1256 = vmatprep.subr.mxu0 0.0
    %1257 = vmatpush1.xpose.msra.mxu0 0.0
    %1258 = vmatprep.mubr.f32.mxu0 0.0
    %1259 = vmatmul.mubr.f32.gmra.mrb[0].mxu0 %v1189
    %v1260 = vpop.f32.mrb[0].mxu0
    %v1261 = vadd.f32 0.0, %v1260
    %v1262 = vpop.f32.mrb[0].mxu0
    %1263 = vmatprep.mubr.f32.mxu0 0.0
    %1264 = vmatmul.mubr.f32.gmra.mrb[0].mxu0 %v1192
    %v1265 = vpop.f32.mrb[0].mxu0
    %v1266 = vadd.f32 0.0, %v1265
    %v1267 = vpop.f32.mrb[0].mxu0
    %1268 = vdwg.mxu0
    %v1269 = vmul.f32 %v1184, 0.0625
    %v1270 = vmul.f32 %v1187, 0.0625
    %v1272 = vsel %vm28, %v1180, 0
    %v1275 = vsel %vm28, %v1181, 0
    %1277 = vmatprep.subr.mxu0 0.0
    %1278 = vmatpush1.msra.mxu0 %v1269
    %1279 = vmatprep.subr.mxu0 0.0
    %1280 = vmatpush1.msra.mxu0 %v1270
    %1281 = vmatprep.subr.mxu0 0.0
    %1282 = vmatpush1.msra.mxu0 0.0
    %1283 = vmatprep.subr.mxu0 0.0
    %1284 = vmatpush1.msra.mxu0 0.0
    %1285 = vmatprep.subr.mxu0 0.0
    %1286 = vmatpush1.msra.mxu0 0.0
    %1287 = vmatprep.subr.mxu0 0.0
    %1288 = vmatpush1.msra.mxu0 0.0
    %1289 = vmatprep.subr.mxu0 0.0
    %1290 = vmatpush1.msra.mxu0 0.0
    %1291 = vmatprep.subr.mxu0 0.0
    %1292 = vmatpush1.msra.mxu0 0.0
    %1293 = vmatprep.subr.mxu0 0.0
    %1294 = vmatpush1.msra.mxu0 0.0
    %1295 = vmatprep.subr.mxu0 0.0
    %1296 = vmatpush1.msra.mxu0 0.0
    %1297 = vmatprep.subr.mxu0 0.0
    %1298 = vmatpush1.msra.mxu0 0.0
    %1299 = vmatprep.subr.mxu0 0.0
    %1300 = vmatpush1.msra.mxu0 0.0
    %1301 = vmatprep.subr.mxu0 0.0
    %1302 = vmatpush1.msra.mxu0 0.0
    %1303 = vmatprep.subr.mxu0 0.0
    %1304 = vmatpush1.msra.mxu0 0.0
    %1305 = vmatprep.subr.mxu0 0.0
    %1306 = vmatpush1.msra.mxu0 0.0
    %1307 = vmatprep.subr.mxu0 0.0
    %1308 = vmatpush1.msra.mxu0 0.0
    %1309 = vmatprep.subr.mxu0 0.0
    %1310 = vmatpush1.msra.mxu0 0.0
    %1311 = vmatprep.subr.mxu0 0.0
    %1312 = vmatpush1.msra.mxu0 0.0
    %1313 = vmatprep.subr.mxu0 0.0
    %1314 = vmatpush1.msra.mxu0 0.0
    %1315 = vmatprep.subr.mxu0 0.0
    %1316 = vmatpush1.msra.mxu0 0.0
    %1317 = vmatprep.subr.mxu0 0.0
    %1318 = vmatpush1.msra.mxu0 0.0
    %1319 = vmatprep.subr.mxu0 0.0
    %1320 = vmatpush1.msra.mxu0 0.0
    %1321 = vmatprep.subr.mxu0 0.0
    %1322 = vmatpush1.msra.mxu0 0.0
    %1323 = vmatprep.subr.mxu0 0.0
    %1324 = vmatpush1.msra.mxu0 0.0
    %1325 = vmatprep.subr.mxu0 0.0
    %1326 = vmatpush1.msra.mxu0 0.0
    %1327 = vmatprep.subr.mxu0 0.0
    %1328 = vmatpush1.msra.mxu0 0.0
    %1329 = vmatprep.subr.mxu0 0.0
    %1330 = vmatpush1.msra.mxu0 0.0
    %1331 = vmatprep.subr.mxu0 0.0
    %1332 = vmatpush1.msra.mxu0 0.0
    %1333 = vmatprep.subr.mxu0 0.0
    %1334 = vmatpush1.msra.mxu0 0.0
    %1335 = vmatprep.subr.mxu0 0.0
    %1336 = vmatpush1.msra.mxu0 0.0
    %1337 = vmatprep.subr.mxu0 0.0
    %1338 = vmatpush1.msra.mxu0 0.0
    %1339 = vmatprep.subr.mxu0 0.0
    %1340 = vmatpush1.msra.mxu0 0.0
    %1341 = vmatprep.mubr.f32.mxu0 0.0
    %1342 = vmatmul.mubr.f32.gmra.mrb[0].mxu0 %v1272
    %v1343 = vpop.f32.mrb[0].mxu0
    %v1344 = vadd.f32 0.0, %v1343
    %v1345 = vpop.f32.mrb[0].mxu0
    %1346 = vmatprep.mubr.f32.mxu0 0.0
    %1347 = vmatmul.mubr.f32.gmra.mrb[0].mxu0 %v1275
    %v1348 = vpop.f32.mrb[0].mxu0
    %v1349 = vadd.f32 0.0, %v1348
    %v1350 = vpop.f32.mrb[0].mxu0
    %1351 = vdwg.mxu0
    %1352 = vmatprep.subr.mxu0 0.0
    %1353 = vmatpush1.msra.mxu0 %v1261
    %1354 = vmatprep.subr.mxu0 0.0
    %1355 = vmatpush1.msra.mxu0 %v1266
    %1356 = vmatprep.subr.mxu0 0.0
    %1357 = vmatpush1.msra.mxu0 0.0
    %1358 = vmatprep.subr.mxu0 0.0
    %1359 = vmatpush1.msra.mxu0 0.0
    %1360 = vmatprep.subr.mxu0 0.0
    %1361 = vmatpush1.msra.mxu0 0.0
    %1362 = vmatprep.subr.mxu0 0.0
    %1363 = vmatpush1.msra.mxu0 0.0
    %1364 = vmatprep.subr.mxu0 0.0
    %1365 = vmatpush1.msra.mxu0 0.0
    %1366 = vmatprep.subr.mxu0 0.0
    %1367 = vmatpush1.msra.mxu0 0.0
    %1368 = vmatprep.subr.mxu0 0.0
    %1369 = vmatpush1.msra.mxu0 0.0
    %1370 = vmatprep.subr.mxu0 0.0
    %1371 = vmatpush1.msra.mxu0 0.0
    %1372 = vmatprep.subr.mxu0 0.0
    %1373 = vmatpush1.msra.mxu0 0.0
    %1374 = vmatprep.subr.mxu0 0.0
    %1375 = vmatpush1.msra.mxu0 0.0
    %1376 = vmatprep.subr.mxu0 0.0
    %1377 = vmatpush1.msra.mxu0 0.0
    %1378 = vmatprep.subr.mxu0 0.0
    %1379 = vmatpush1.msra.mxu0 0.0
    %1380 = vmatprep.subr.mxu0 0.0
    %1381 = vmatpush1.msra.mxu0 0.0
    %1382 = vmatprep.subr.mxu0 0.0
    %1383 = vmatpush1.msra.mxu0 0.0
    %1384 = vmatprep.subr.mxu0 0.0
    %1385 = vmatpush1.msra.mxu0 0.0
    %1386 = vmatprep.subr.mxu0 0.0
    %1387 = vmatpush1.msra.mxu0 0.0
    %1388 = vmatprep.subr.mxu0 0.0
    %1389 = vmatpush1.msra.mxu0 0.0
    %1390 = vmatprep.subr.mxu0 0.0
    %1391 = vmatpush1.msra.mxu0 0.0
    %1392 = vmatprep.subr.mxu0 0.0
    %1393 = vmatpush1.msra.mxu0 0.0
    %1394 = vmatprep.subr.mxu0 0.0
    %1395 = vmatpush1.msra.mxu0 0.0
    %1396 = vmatprep.subr.mxu0 0.0
    %1397 = vmatpush1.msra.mxu0 0.0
    %1398 = vmatprep.subr.mxu0 0.0
    %1399 = vmatpush1.msra.mxu0 0.0
    %1400 = vmatprep.subr.mxu0 0.0
    %1401 = vmatpush1.msra.mxu0 0.0
    %1402 = vmatprep.subr.mxu0 0.0
    %1403 = vmatpush1.msra.mxu0 0.0
    %1404 = vmatprep.subr.mxu0 0.0
    %1405 = vmatpush1.msra.mxu0 0.0
    %1406 = vmatprep.subr.mxu0 0.0
    %1407 = vmatpush1.msra.mxu0 0.0
    %1408 = vmatprep.subr.mxu0 0.0
    %1409 = vmatpush1.msra.mxu0 0.0
    %1410 = vmatprep.subr.mxu0 0.0
    %1411 = vmatpush1.msra.mxu0 0.0
    %1412 = vmatprep.subr.mxu0 0.0
    %1413 = vmatpush1.msra.mxu0 0.0
    %1414 = vmatprep.subr.mxu0 0.0
    %1415 = vmatpush1.msra.mxu0 0.0
    %1416 = vmatprep.mubr.f32.mxu0 0.0
    %1417 = vmatmul.mubr.f32.gmra.mrb[0].mxu0 %v1272
    %v1418 = vpop.f32.mrb[0].mxu0
    %v1419 = vadd.f32 0.0, %v1418
    %v1420 = vpop.f32.mrb[0].mxu0
    %1421 = vmatprep.mubr.f32.mxu0 0.0
    %1422 = vmatmul.mubr.f32.gmra.mrb[0].mxu0 %v1275
    %v1423 = vpop.f32.mrb[0].mxu0
    %v1424 = vadd.f32 0.0, %v1423
    %v1425 = vpop.f32.mrb[0].mxu0
    %1426 = vdwg.mxu0
    %v1427 = vmul.f32 %v1419, 0.0625
    %v1428 = vmul.f32 %v1424, 0.0625
    %v1429 = vmul.f32 %v1427, %v1180
    %v1430 = vmul.f32 %v1428, %v1181
    %v1431 = vsel %vm28, %v1429, 0.0
    %1432 = vadd.xlane.f32.xlu0 %v1431
    %v1433 = vpop.xlane.xlu0 %1432
    %v1434 = vsel %vm28, %v1430, 0.0
    %1435 = vadd.xlane.f32.xlu0 %v1434
    %v1436 = vpop.xlane.xlu0 %1435
    %v1437 = vmul.f32 %v1344, %v1344
    %v1438 = vmul.f32 %v1349, %v1349
    %v1439 = vsub.f32 %v1433, %v1437
    %v1440 = vsub.f32 %v1436, %v1438
    %v1441 = vmax.f32 %v1439, 0.0
    %v1442 = vmax.f32 %v1440, 0.0
    %s1443 = scalar_lea.vmem %s2, 48
    %v1444 = vld [vmem:[%s1443] sm:$0xff]
    %v1445 = vld [vmem:[%s1443 + $0x8] sm:$0xff]
    %v1446 = vadd.f32 %v1441, 1e-05
    %v1447 = vadd.f32 %v1442, 1e-05
    %v1448 = vrsqrt.pop %v1446
    %v1449 = vrsqrt.pop %v1447
    %v1450 = vmul.f32 %v1444, %v1448
    %v1451 = vmul.f32 %v1445, %v1449
    %s1452 = scalar_lea.vmem %s3, 48
    %v1453 = vld [vmem:[%s1452] sm:$0xff]
    %v1454 = vld [vmem:[%s1452 + $0x8] sm:$0xff]
    %v1455 = vmul.f32 %v1344, %v1450
    %v1456 = vmul.f32 %v1349, %v1451
    %v1457 = vsub.f32 %v1453, %v1455
    %v1458 = vsub.f32 %v1454, %v1456
    %1460 = vset.pattern.permute.xlu0 0
    %1461 = vperm.xlu0 %1460, %v1450
    %v1462 = vpop.permute.xlu0 %1461
    %1465 = vset.pattern.permute.xlu0 0
    %1466 = vperm.xlu0 %1465, %v1451
    %v1467 = vpop.permute.xlu0 %1466
    %v1469 = vmul.f32 %v1462, %v1180
    %v1470 = vmul.f32 %v1467, %v1181
    %1472 = vset.pattern.permute.xlu0 0
    %1473 = vperm.xlu0 %1472, %v1457
    %v1474 = vpop.permute.xlu0 %1473
    %1477 = vset.pattern.permute.xlu0 0
    %1478 = vperm.xlu0 %1477, %v1458
    %v1479 = vpop.permute.xlu0 %1478
    %v1482 = vsel %vm28, %v1469, 0
    %v1485 = vsel %vm28, %v1470, 0
    %1487 = vmatprep.subr.mxu0 0.0
    %1488 = vmatpush1.msra.mxu0 %v1177
    %1489 = vmatprep.subr.mxu0 0.0
    %1490 = vmatpush1.msra.mxu0 %v1178
    %1491 = vmatprep.subr.mxu0 0.0
    %1492 = vmatpush1.msra.mxu0 0.0
    %1493 = vmatprep.subr.mxu0 0.0
    %1494 = vmatpush1.msra.mxu0 0.0
    %1495 = vmatprep.subr.mxu0 0.0
    %1496 = vmatpush1.msra.mxu0 0.0
    %1497 = vmatprep.subr.mxu0 0.0
    %1498 = vmatpush1.msra.mxu0 0.0
    %1499 = vmatprep.subr.mxu0 0.0
    %1500 = vmatpush1.msra.mxu0 0.0
    %1501 = vmatprep.subr.mxu0 0.0
    %1502 = vmatpush1.msra.mxu0 0.0
    %1503 = vmatprep.subr.mxu0 0.0
    %1504 = vmatpush1.msra.mxu0 0.0
    %1505 = vmatprep.subr.mxu0 0.0
    %1506 = vmatpush1.msra.mxu0 0.0
    %1507 = vmatprep.subr.mxu0 0.0
    %1508 = vmatpush1.msra.mxu0 0.0
    %1509 = vmatprep.subr.mxu0 0.0
    %1510 = vmatpush1.msra.mxu0 0.0
    %1511 = vmatprep.subr.mxu0 0.0
    %1512 = vmatpush1.msra.mxu0 0.0
    %1513 = vmatprep.subr.mxu0 0.0
    %1514 = vmatpush1.msra.mxu0 0.0
    %1515 = vmatprep.subr.mxu0 0.0
    %1516 = vmatpush1.msra.mxu0 0.0
    %1517 = vmatprep.subr.mxu0 0.0
    %1518 = vmatpush1.msra.mxu0 0.0
    %1519 = vmatprep.subr.mxu0 0.0
    %1520 = vmatpush1.msra.mxu0 0.0
    %1521 = vmatprep.subr.mxu0 0.0
    %1522 = vmatpush1.msra.mxu0 0.0
    %1523 = vmatprep.subr.mxu0 0.0
    %1524 = vmatpush1.msra.mxu0 0.0
    %1525 = vmatprep.subr.mxu0 0.0
    %1526 = vmatpush1.msra.mxu0 0.0
    %1527 = vmatprep.subr.mxu0 0.0
    %1528 = vmatpush1.msra.mxu0 0.0
    %1529 = vmatprep.subr.mxu0 0.0
    %1530 = vmatpush1.msra.mxu0 0.0
    %1531 = vmatprep.subr.mxu0 0.0
    %1532 = vmatpush1.msra.mxu0 0.0
    %1533 = vmatprep.subr.mxu0 0.0
    %1534 = vmatpush1.msra.mxu0 0.0
    %1535 = vmatprep.subr.mxu0 0.0
    %1536 = vmatpush1.msra.mxu0 0.0
    %1537 = vmatprep.subr.mxu0 0.0
    %1538 = vmatpush1.msra.mxu0 0.0
    %1539 = vmatprep.subr.mxu0 0.0
    %1540 = vmatpush1.msra.mxu0 0.0
    %1541 = vmatprep.subr.mxu0 0.0
    %1542 = vmatpush1.msra.mxu0 0.0
    %1543 = vmatprep.subr.mxu0 0.0
    %1544 = vmatpush1.msra.mxu0 0.0
    %1545 = vmatprep.subr.mxu0 0.0
    %1546 = vmatpush1.msra.mxu0 0.0
    %1547 = vmatprep.subr.mxu0 0.0
    %1548 = vmatpush1.msra.mxu0 0.0
    %1549 = vmatprep.subr.mxu0 0.0
    %1550 = vmatpush1.msra.mxu0 0.0
    %1551 = vmatprep.mubr.f32.mxu0 0.0
    %1552 = vmatmul.mubr.f32.gmra.mrb[0].mxu0 %v1482
    %v1553 = vpop.f32.mrb[0].mxu0
    %v1554 = vadd.f32 %v1474, %v1553
    %v1555 = vpop.f32.mrb[0].mxu0
    %1556 = vmatprep.mubr.f32.mxu0 0.0
    %1557 = vmatmul.mubr.f32.gmra.mrb[0].mxu0 %v1485
    %v1558 = vpop.f32.mrb[0].mxu0
    %v1559 = vadd.f32 %v1479, %v1558
    %v1560 = vpop.f32.mrb[0].mxu0
    %1561 = vdwg.mxu0
    %v1562 = vmax.f32 %v1554, 0.0
    %v1563 = vmax.f32 %v1559, 0.0
    %s1564 = scalar_lea.vmem %s1, 64
    %v1565 = vld [vmem:[%s1564] sm:$0xff]
    %v1566 = vld [vmem:[%s1564 + $0x8] sm:$0xff]
    %v1567 = vsel %vm28, %v1562, 0.0
    %1568 = vadd.xlane.f32.xlu0 %v1567
    %v1569 = vpop.xlane.xlu0 %1568
    %v1570 = vsel %vm28, %v1563, 0.0
    %1571 = vadd.xlane.f32.xlu0 %v1570
    %v1572 = vpop.xlane.xlu0 %1571
    %v1574 = vsel %vm28, %v1562, 0
    %v1577 = vsel %vm28, %v1563, 0
    %1579 = vmatprep.subr.mxu0 0.0
    %1580 = vmatpush1.xpose.msra.mxu0 %v1574
    %1581 = vmatprep.subr.mxu0 0.0
    %1582 = vmatpush1.xpose.msra.mxu0 %v1577
    %1583 = vmatprep.subr.mxu0 0.0
    %1584 = vmatpush1.xpose.msra.mxu0 0.0
    %1585 = vmatprep.subr.mxu0 0.0
    %1586 = vmatpush1.xpose.msra.mxu0 0.0
    %1587 = vmatprep.subr.mxu0 0.0
    %1588 = vmatpush1.xpose.msra.mxu0 0.0
    %1589 = vmatprep.subr.mxu0 0.0
    %1590 = vmatpush1.xpose.msra.mxu0 0.0
    %1591 = vmatprep.subr.mxu0 0.0
    %1592 = vmatpush1.xpose.msra.mxu0 0.0
    %1593 = vmatprep.subr.mxu0 0.0
    %1594 = vmatpush1.xpose.msra.mxu0 0.0
    %1595 = vmatprep.subr.mxu0 0.0
    %1596 = vmatpush1.xpose.msra.mxu0 0.0
    %1597 = vmatprep.subr.mxu0 0.0
    %1598 = vmatpush1.xpose.msra.mxu0 0.0
    %1599 = vmatprep.subr.mxu0 0.0
    %1600 = vmatpush1.xpose.msra.mxu0 0.0
    %1601 = vmatprep.subr.mxu0 0.0
    %1602 = vmatpush1.xpose.msra.mxu0 0.0
    %1603 = vmatprep.subr.mxu0 0.0
    %1604 = vmatpush1.xpose.msra.mxu0 0.0
    %1605 = vmatprep.subr.mxu0 0.0
    %1606 = vmatpush1.xpose.msra.mxu0 0.0
    %1607 = vmatprep.subr.mxu0 0.0
    %1608 = vmatpush1.xpose.msra.mxu0 0.0
    %1609 = vmatprep.subr.mxu0 0.0
    %1610 = vmatpush1.xpose.msra.mxu0 0.0
    %1611 = vmatprep.subr.mxu0 0.0
    %1612 = vmatpush1.xpose.msra.mxu0 0.0
    %1613 = vmatprep.subr.mxu0 0.0
    %1614 = vmatpush1.xpose.msra.mxu0 0.0
    %1615 = vmatprep.subr.mxu0 0.0
    %1616 = vmatpush1.xpose.msra.mxu0 0.0
    %1617 = vmatprep.subr.mxu0 0.0
    %1618 = vmatpush1.xpose.msra.mxu0 0.0
    %1619 = vmatprep.subr.mxu0 0.0
    %1620 = vmatpush1.xpose.msra.mxu0 0.0
    %1621 = vmatprep.subr.mxu0 0.0
    %1622 = vmatpush1.xpose.msra.mxu0 0.0
    %1623 = vmatprep.subr.mxu0 0.0
    %1624 = vmatpush1.xpose.msra.mxu0 0.0
    %1625 = vmatprep.subr.mxu0 0.0
    %1626 = vmatpush1.xpose.msra.mxu0 0.0
    %1627 = vmatprep.subr.mxu0 0.0
    %1628 = vmatpush1.xpose.msra.mxu0 0.0
    %1629 = vmatprep.subr.mxu0 0.0
    %1630 = vmatpush1.xpose.msra.mxu0 0.0
    %1631 = vmatprep.subr.mxu0 0.0
    %1632 = vmatpush1.xpose.msra.mxu0 0.0
    %1633 = vmatprep.subr.mxu0 0.0
    %1634 = vmatpush1.xpose.msra.mxu0 0.0
    %1635 = vmatprep.subr.mxu0 0.0
    %1636 = vmatpush1.xpose.msra.mxu0 0.0
    %1637 = vmatprep.subr.mxu0 0.0
    %1638 = vmatpush1.xpose.msra.mxu0 0.0
    %1639 = vmatprep.subr.mxu0 0.0
    %1640 = vmatpush1.xpose.msra.mxu0 0.0
    %1641 = vmatprep.subr.mxu0 0.0
    %1642 = vmatpush1.xpose.msra.mxu0 0.0
    %1643 = vmatprep.mubr.f32.mxu0 0.0
    %1644 = vmatmul.mubr.f32.gmra.mrb[0].mxu0 %v1574
    %v1645 = vpop.f32.mrb[0].mxu0
    %v1646 = vadd.f32 0.0, %v1645
    %v1647 = vpop.f32.mrb[0].mxu0
    %1648 = vmatprep.mubr.f32.mxu0 0.0
    %1649 = vmatmul.mubr.f32.gmra.mrb[0].mxu0 %v1577
    %v1650 = vpop.f32.mrb[0].mxu0
    %v1651 = vadd.f32 0.0, %v1650
    %v1652 = vpop.f32.mrb[0].mxu0
    %1653 = vdwg.mxu0
    %v1654 = vmul.f32 %v1569, 0.0625
    %v1655 = vmul.f32 %v1572, 0.0625
    %v1657 = vsel %vm28, %v1565, 0
    %v1660 = vsel %vm28, %v1566, 0
    %1662 = vmatprep.subr.mxu0 0.0
    %1663 = vmatpush1.msra.mxu0 %v1654
    %1664 = vmatprep.subr.mxu0 0.0
    %1665 = vmatpush1.msra.mxu0 %v1655
    %1666 = vmatprep.subr.mxu0 0.0
    %1667 = vmatpush1.msra.mxu0 0.0
    %1668 = vmatprep.subr.mxu0 0.0
    %1669 = vmatpush1.msra.mxu0 0.0
    %1670 = vmatprep.subr.mxu0 0.0
    %1671 = vmatpush1.msra.mxu0 0.0
    %1672 = vmatprep.subr.mxu0 0.0
    %1673 = vmatpush1.msra.mxu0 0.0
    %1674 = vmatprep.subr.mxu0 0.0
    %1675 = vmatpush1.msra.mxu0 0.0
    %1676 = vmatprep.subr.mxu0 0.0
    %1677 = vmatpush1.msra.mxu0 0.0
    %1678 = vmatprep.subr.mxu0 0.0
    %1679 = vmatpush1.msra.mxu0 0.0
    %1680 = vmatprep.subr.mxu0 0.0
    %1681 = vmatpush1.msra.mxu0 0.0
    %1682 = vmatprep.subr.mxu0 0.0
    %1683 = vmatpush1.msra.mxu0 0.0
    %1684 = vmatprep.subr.mxu0 0.0
    %1685 = vmatpush1.msra.mxu0 0.0
    %1686 = vmatprep.subr.mxu0 0.0
    %1687 = vmatpush1.msra.mxu0 0.0
    %1688 = vmatprep.subr.mxu0 0.0
    %1689 = vmatpush1.msra.mxu0 0.0
    %1690 = vmatprep.subr.mxu0 0.0
    %1691 = vmatpush1.msra.mxu0 0.0
    %1692 = vmatprep.subr.mxu0 0.0
    %1693 = vmatpush1.msra.mxu0 0.0
    %1694 = vmatprep.subr.mxu0 0.0
    %1695 = vmatpush1.msra.mxu0 0.0
    %1696 = vmatprep.subr.mxu0 0.0
    %1697 = vmatpush1.msra.mxu0 0.0
    %1698 = vmatprep.subr.mxu0 0.0
    %1699 = vmatpush1.msra.mxu0 0.0
    %1700 = vmatprep.subr.mxu0 0.0
    %1701 = vmatpush1.msra.mxu0 0.0
    %1702 = vmatprep.subr.mxu0 0.0
    %1703 = vmatpush1.msra.mxu0 0.0
    %1704 = vmatprep.subr.mxu0 0.0
    %1705 = vmatpush1.msra.mxu0 0.0
    %1706 = vmatprep.subr.mxu0 0.0
    %1707 = vmatpush1.msra.mxu0 0.0
    %1708 = vmatprep.subr.mxu0 0.0
    %1709 = vmatpush1.msra.mxu0 0.0
    %1710 = vmatprep.subr.mxu0 0.0
    %1711 = vmatpush1.msra.mxu0 0.0
    %1712 = vmatprep.subr.mxu0 0.0
    %1713 = vmatpush1.msra.mxu0 0.0
    %1714 = vmatprep.subr.mxu0 0.0
    %1715 = vmatpush1.msra.mxu0 0.0
    %1716 = vmatprep.subr.mxu0 0.0
    %1717 = vmatpush1.msra.mxu0 0.0
    %1718 = vmatprep.subr.mxu0 0.0
    %1719 = vmatpush1.msra.mxu0 0.0
    %1720 = vmatprep.subr.mxu0 0.0
    %1721 = vmatpush1.msra.mxu0 0.0
    %1722 = vmatprep.subr.mxu0 0.0
    %1723 = vmatpush1.msra.mxu0 0.0
    %1724 = vmatprep.subr.mxu0 0.0
    %1725 = vmatpush1.msra.mxu0 0.0
    %1726 = vmatprep.mubr.f32.mxu0 0.0
    %1727 = vmatmul.mubr.f32.gmra.mrb[0].mxu0 %v1657
    %v1728 = vpop.f32.mrb[0].mxu0
    %v1729 = vadd.f32 0.0, %v1728
    %v1730 = vpop.f32.mrb[0].mxu0
    %1731 = vmatprep.mubr.f32.mxu0 0.0
    %1732 = vmatmul.mubr.f32.gmra.mrb[0].mxu0 %v1660
    %v1733 = vpop.f32.mrb[0].mxu0
    %v1734 = vadd.f32 0.0, %v1733
    %v1735 = vpop.f32.mrb[0].mxu0
    %1736 = vdwg.mxu0
    %1737 = vmatprep.subr.mxu0 0.0
    %1738 = vmatpush1.msra.mxu0 %v1646
    %1739 = vmatprep.subr.mxu0 0.0
    %1740 = vmatpush1.msra.mxu0 %v1651
    %1741 = vmatprep.subr.mxu0 0.0
    %1742 = vmatpush1.msra.mxu0 0.0
    %1743 = vmatprep.subr.mxu0 0.0
    %1744 = vmatpush1.msra.mxu0 0.0
    %1745 = vmatprep.subr.mxu0 0.0
    %1746 = vmatpush1.msra.mxu0 0.0
    %1747 = vmatprep.subr.mxu0 0.0
    %1748 = vmatpush1.msra.mxu0 0.0
    %1749 = vmatprep.subr.mxu0 0.0
    %1750 = vmatpush1.msra.mxu0 0.0
    %1751 = vmatprep.subr.mxu0 0.0
    %1752 = vmatpush1.msra.mxu0 0.0
    %1753 = vmatprep.subr.mxu0 0.0
    %1754 = vmatpush1.msra.mxu0 0.0
    %1755 = vmatprep.subr.mxu0 0.0
    %1756 = vmatpush1.msra.mxu0 0.0
    %1757 = vmatprep.subr.mxu0 0.0
    %1758 = vmatpush1.msra.mxu0 0.0
    %1759 = vmatprep.subr.mxu0 0.0
    %1760 = vmatpush1.msra.mxu0 0.0
    %1761 = vmatprep.subr.mxu0 0.0
    %1762 = vmatpush1.msra.mxu0 0.0
    %1763 = vmatprep.subr.mxu0 0.0
    %1764 = vmatpush1.msra.mxu0 0.0
    %1765 = vmatprep.subr.mxu0 0.0
    %1766 = vmatpush1.msra.mxu0 0.0
    %1767 = vmatprep.subr.mxu0 0.0
    %1768 = vmatpush1.msra.mxu0 0.0
    %1769 = vmatprep.subr.mxu0 0.0
    %1770 = vmatpush1.msra.mxu0 0.0
    %1771 = vmatprep.subr.mxu0 0.0
    %1772 = vmatpush1.msra.mxu0 0.0
    %1773 = vmatprep.subr.mxu0 0.0
    %1774 = vmatpush1.msra.mxu0 0.0
    %1775 = vmatprep.subr.mxu0 0.0
    %1776 = vmatpush1.msra.mxu0 0.0
    %1777 = vmatprep.subr.mxu0 0.0
    %1778 = vmatpush1.msra.mxu0 0.0
    %1779 = vmatprep.subr.mxu0 0.0
    %1780 = vmatpush1.msra.mxu0 0.0
    %1781 = vmatprep.subr.mxu0 0.0
    %1782 = vmatpush1.msra.mxu0 0.0
    %1783 = vmatprep.subr.mxu0 0.0
    %1784 = vmatpush1.msra.mxu0 0.0
    %1785 = vmatprep.subr.mxu0 0.0
    %1786 = vmatpush1.msra.mxu0 0.0
    %1787 = vmatprep.subr.mxu0 0.0
    %1788 = vmatpush1.msra.mxu0 0.0
    %1789 = vmatprep.subr.mxu0 0.0
    %1790 = vmatpush1.msra.mxu0 0.0
    %1791 = vmatprep.subr.mxu0 0.0
    %1792 = vmatpush1.msra.mxu0 0.0
    %1793 = vmatprep.subr.mxu0 0.0
    %1794 = vmatpush1.msra.mxu0 0.0
    %1795 = vmatprep.subr.mxu0 0.0
    %1796 = vmatpush1.msra.mxu0 0.0
    %1797 = vmatprep.subr.mxu0 0.0
    %1798 = vmatpush1.msra.mxu0 0.0
    %1799 = vmatprep.subr.mxu0 0.0
    %1800 = vmatpush1.msra.mxu0 0.0
    %1801 = vmatprep.mubr.f32.mxu0 0.0
    %1802 = vmatmul.mubr.f32.gmra.mrb[0].mxu0 %v1657
    %v1803 = vpop.f32.mrb[0].mxu0
    %v1804 = vadd.f32 0.0, %v1803
    %v1805 = vpop.f32.mrb[0].mxu0
    %1806 = vmatprep.mubr.f32.mxu0 0.0
    %1807 = vmatmul.mubr.f32.gmra.mrb[0].mxu0 %v1660
    %v1808 = vpop.f32.mrb[0].mxu0
    %v1809 = vadd.f32 0.0, %v1808
    %v1810 = vpop.f32.mrb[0].mxu0
    %1811 = vdwg.mxu0
    %v1812 = vmul.f32 %v1804, 0.0625
    %v1813 = vmul.f32 %v1809, 0.0625
    %v1814 = vmul.f32 %v1812, %v1565
    %v1815 = vmul.f32 %v1813, %v1566
    %v1816 = vsel %vm28, %v1814, 0.0
    %1817 = vadd.xlane.f32.xlu0 %v1816
    %v1818 = vpop.xlane.xlu0 %1817
    %v1819 = vsel %vm28, %v1815, 0.0
    %1820 = vadd.xlane.f32.xlu0 %v1819
    %v1821 = vpop.xlane.xlu0 %1820
    %v1822 = vmul.f32 %v1729, %v1729
    %v1823 = vmul.f32 %v1734, %v1734
    %v1824 = vsub.f32 %v1818, %v1822
    %v1825 = vsub.f32 %v1821, %v1823
    %v1826 = vmax.f32 %v1824, 0.0
    %v1827 = vmax.f32 %v1825, 0.0
    %s1828 = scalar_lea.vmem %s2, 64
    %v1829 = vld [vmem:[%s1828] sm:$0xff]
    %v1830 = vld [vmem:[%s1828 + $0x8] sm:$0xff]
    %v1831 = vadd.f32 %v1826, 1e-05
    %v1832 = vadd.f32 %v1827, 1e-05
    %v1833 = vrsqrt.pop %v1831
    %v1834 = vrsqrt.pop %v1832
    %v1835 = vmul.f32 %v1829, %v1833
    %v1836 = vmul.f32 %v1830, %v1834
    %s1837 = scalar_lea.vmem %s3, 64
    %v1838 = vld [vmem:[%s1837] sm:$0xff]
    %v1839 = vld [vmem:[%s1837 + $0x8] sm:$0xff]
    %v1840 = vmul.f32 %v1729, %v1835
    %v1841 = vmul.f32 %v1734, %v1836
    %v1842 = vsub.f32 %v1838, %v1840
    %v1843 = vsub.f32 %v1839, %v1841
    %1845 = vset.pattern.permute.xlu0 0
    %1846 = vperm.xlu0 %1845, %v1835
    %v1847 = vpop.permute.xlu0 %1846
    %1850 = vset.pattern.permute.xlu0 0
    %1851 = vperm.xlu0 %1850, %v1836
    %v1852 = vpop.permute.xlu0 %1851
    %v1854 = vmul.f32 %v1847, %v1565
    %v1855 = vmul.f32 %v1852, %v1566
    %1857 = vset.pattern.permute.xlu0 0
    %1858 = vperm.xlu0 %1857, %v1842
    %v1859 = vpop.permute.xlu0 %1858
    %1862 = vset.pattern.permute.xlu0 0
    %1863 = vperm.xlu0 %1862, %v1843
    %v1864 = vpop.permute.xlu0 %1863
    %v1867 = vsel %vm28, %v1854, 0
    %v1870 = vsel %vm28, %v1855, 0
    %1872 = vmatprep.subr.mxu0 0.0
    %1873 = vmatpush1.msra.mxu0 %v1562
    %1874 = vmatprep.subr.mxu0 0.0
    %1875 = vmatpush1.msra.mxu0 %v1563
    %1876 = vmatprep.subr.mxu0 0.0
    %1877 = vmatpush1.msra.mxu0 0.0
    %1878 = vmatprep.subr.mxu0 0.0
    %1879 = vmatpush1.msra.mxu0 0.0
    %1880 = vmatprep.subr.mxu0 0.0
    %1881 = vmatpush1.msra.mxu0 0.0
    %1882 = vmatprep.subr.mxu0 0.0
    %1883 = vmatpush1.msra.mxu0 0.0
    %1884 = vmatprep.subr.mxu0 0.0
    %1885 = vmatpush1.msra.mxu0 0.0
    %1886 = vmatprep.subr.mxu0 0.0
    %1887 = vmatpush1.msra.mxu0 0.0
    %1888 = vmatprep.subr.mxu0 0.0
    %1889 = vmatpush1.msra.mxu0 0.0
    %1890 = vmatprep.subr.mxu0 0.0
    %1891 = vmatpush1.msra.mxu0 0.0
    %1892 = vmatprep.subr.mxu0 0.0
    %1893 = vmatpush1.msra.mxu0 0.0
    %1894 = vmatprep.subr.mxu0 0.0
    %1895 = vmatpush1.msra.mxu0 0.0
    %1896 = vmatprep.subr.mxu0 0.0
    %1897 = vmatpush1.msra.mxu0 0.0
    %1898 = vmatprep.subr.mxu0 0.0
    %1899 = vmatpush1.msra.mxu0 0.0
    %1900 = vmatprep.subr.mxu0 0.0
    %1901 = vmatpush1.msra.mxu0 0.0
    %1902 = vmatprep.subr.mxu0 0.0
    %1903 = vmatpush1.msra.mxu0 0.0
    %1904 = vmatprep.subr.mxu0 0.0
    %1905 = vmatpush1.msra.mxu0 0.0
    %1906 = vmatprep.subr.mxu0 0.0
    %1907 = vmatpush1.msra.mxu0 0.0
    %1908 = vmatprep.subr.mxu0 0.0
    %1909 = vmatpush1.msra.mxu0 0.0
    %1910 = vmatprep.subr.mxu0 0.0
    %1911 = vmatpush1.msra.mxu0 0.0
    %1912 = vmatprep.subr.mxu0 0.0
    %1913 = vmatpush1.msra.mxu0 0.0
    %1914 = vmatprep.subr.mxu0 0.0
    %1915 = vmatpush1.msra.mxu0 0.0
    %1916 = vmatprep.subr.mxu0 0.0
    %1917 = vmatpush1.msra.mxu0 0.0
    %1918 = vmatprep.subr.mxu0 0.0
    %1919 = vmatpush1.msra.mxu0 0.0
    %1920 = vmatprep.subr.mxu0 0.0
    %1921 = vmatpush1.msra.mxu0 0.0
    %1922 = vmatprep.subr.mxu0 0.0
    %1923 = vmatpush1.msra.mxu0 0.0
    %1924 = vmatprep.subr.mxu0 0.0
    %1925 = vmatpush1.msra.mxu0 0.0
    %1926 = vmatprep.subr.mxu0 0.0
    %1927 = vmatpush1.msra.mxu0 0.0
    %1928 = vmatprep.subr.mxu0 0.0
    %1929 = vmatpush1.msra.mxu0 0.0
    %1930 = vmatprep.subr.mxu0 0.0
    %1931 = vmatpush1.msra.mxu0 0.0
    %1932 = vmatprep.subr.mxu0 0.0
    %1933 = vmatpush1.msra.mxu0 0.0
    %1934 = vmatprep.subr.mxu0 0.0
    %1935 = vmatpush1.msra.mxu0 0.0
    %1936 = vmatprep.mubr.f32.mxu0 0.0
    %1937 = vmatmul.mubr.f32.gmra.mrb[0].mxu0 %v1867
    %v1938 = vpop.f32.mrb[0].mxu0
    %v1939 = vadd.f32 %v1859, %v1938
    %v1940 = vpop.f32.mrb[0].mxu0
    %1941 = vmatprep.mubr.f32.mxu0 0.0
    %1942 = vmatmul.mubr.f32.gmra.mrb[0].mxu0 %v1870
    %v1943 = vpop.f32.mrb[0].mxu0
    %v1944 = vadd.f32 %v1864, %v1943
    %v1945 = vpop.f32.mrb[0].mxu0
    %1946 = vdwg.mxu0
    %v1947 = vmax.f32 %v1939, 0.0
    %v1948 = vmax.f32 %v1944, 0.0
    %s1949 = scalar_lea.vmem %s1, 80
    %v1950 = vld [vmem:[%s1949] sm:$0xff]
    %v1951 = vld [vmem:[%s1949 + $0x8] sm:$0xff]
    %v1952 = vsel %vm28, %v1947, 0.0
    %1953 = vadd.xlane.f32.xlu0 %v1952
    %v1954 = vpop.xlane.xlu0 %1953
    %v1955 = vsel %vm28, %v1948, 0.0
    %1956 = vadd.xlane.f32.xlu0 %v1955
    %v1957 = vpop.xlane.xlu0 %1956
    %v1959 = vsel %vm28, %v1947, 0
    %v1962 = vsel %vm28, %v1948, 0
    %1964 = vmatprep.subr.mxu0 0.0
    %1965 = vmatpush1.xpose.msra.mxu0 %v1959
    %1966 = vmatprep.subr.mxu0 0.0
    %1967 = vmatpush1.xpose.msra.mxu0 %v1962
    %1968 = vmatprep.subr.mxu0 0.0
    %1969 = vmatpush1.xpose.msra.mxu0 0.0
    %1970 = vmatprep.subr.mxu0 0.0
    %1971 = vmatpush1.xpose.msra.mxu0 0.0
    %1972 = vmatprep.subr.mxu0 0.0
    %1973 = vmatpush1.xpose.msra.mxu0 0.0
    %1974 = vmatprep.subr.mxu0 0.0
    %1975 = vmatpush1.xpose.msra.mxu0 0.0
    %1976 = vmatprep.subr.mxu0 0.0
    %1977 = vmatpush1.xpose.msra.mxu0 0.0
    %1978 = vmatprep.subr.mxu0 0.0
    %1979 = vmatpush1.xpose.msra.mxu0 0.0
    %1980 = vmatprep.subr.mxu0 0.0
    %1981 = vmatpush1.xpose.msra.mxu0 0.0
    %1982 = vmatprep.subr.mxu0 0.0
    %1983 = vmatpush1.xpose.msra.mxu0 0.0
    %1984 = vmatprep.subr.mxu0 0.0
    %1985 = vmatpush1.xpose.msra.mxu0 0.0
    %1986 = vmatprep.subr.mxu0 0.0
    %1987 = vmatpush1.xpose.msra.mxu0 0.0
    %1988 = vmatprep.subr.mxu0 0.0
    %1989 = vmatpush1.xpose.msra.mxu0 0.0
    %1990 = vmatprep.subr.mxu0 0.0
    %1991 = vmatpush1.xpose.msra.mxu0 0.0
    %1992 = vmatprep.subr.mxu0 0.0
    %1993 = vmatpush1.xpose.msra.mxu0 0.0
    %1994 = vmatprep.subr.mxu0 0.0
    %1995 = vmatpush1.xpose.msra.mxu0 0.0
    %1996 = vmatprep.subr.mxu0 0.0
    %1997 = vmatpush1.xpose.msra.mxu0 0.0
    %1998 = vmatprep.subr.mxu0 0.0
    %1999 = vmatpush1.xpose.msra.mxu0 0.0
    %2000 = vmatprep.subr.mxu0 0.0
    %2001 = vmatpush1.xpose.msra.mxu0 0.0
    %2002 = vmatprep.subr.mxu0 0.0
    %2003 = vmatpush1.xpose.msra.mxu0 0.0
    %2004 = vmatprep.subr.mxu0 0.0
    %2005 = vmatpush1.xpose.msra.mxu0 0.0
    %2006 = vmatprep.subr.mxu0 0.0
    %2007 = vmatpush1.xpose.msra.mxu0 0.0
    %2008 = vmatprep.subr.mxu0 0.0
    %2009 = vmatpush1.xpose.msra.mxu0 0.0
    %2010 = vmatprep.subr.mxu0 0.0
    %2011 = vmatpush1.xpose.msra.mxu0 0.0
    %2012 = vmatprep.subr.mxu0 0.0
    %2013 = vmatpush1.xpose.msra.mxu0 0.0
    %2014 = vmatprep.subr.mxu0 0.0
    %2015 = vmatpush1.xpose.msra.mxu0 0.0
    %2016 = vmatprep.subr.mxu0 0.0
    %2017 = vmatpush1.xpose.msra.mxu0 0.0
    %2018 = vmatprep.subr.mxu0 0.0
    %2019 = vmatpush1.xpose.msra.mxu0 0.0
    %2020 = vmatprep.subr.mxu0 0.0
    %2021 = vmatpush1.xpose.msra.mxu0 0.0
    %2022 = vmatprep.subr.mxu0 0.0
    %2023 = vmatpush1.xpose.msra.mxu0 0.0
    %2024 = vmatprep.subr.mxu0 0.0
    %2025 = vmatpush1.xpose.msra.mxu0 0.0
    %2026 = vmatprep.subr.mxu0 0.0
    %2027 = vmatpush1.xpose.msra.mxu0 0.0
    %2028 = vmatprep.mubr.f32.mxu0 0.0
    %2029 = vmatmul.mubr.f32.gmra.mrb[0].mxu0 %v1959
    %v2030 = vpop.f32.mrb[0].mxu0
    %v2031 = vadd.f32 0.0, %v2030
    %v2032 = vpop.f32.mrb[0].mxu0
    %2033 = vmatprep.mubr.f32.mxu0 0.0
    %2034 = vmatmul.mubr.f32.gmra.mrb[0].mxu0 %v1962
    %v2035 = vpop.f32.mrb[0].mxu0
    %v2036 = vadd.f32 0.0, %v2035
    %v2037 = vpop.f32.mrb[0].mxu0
    %2038 = vdwg.mxu0
    %v2039 = vmul.f32 %v1954, 0.0625
    %v2040 = vmul.f32 %v1957, 0.0625
    %v2042 = vsel %vm28, %v1950, 0
    %v2045 = vsel %vm28, %v1951, 0
    %2047 = vmatprep.subr.mxu0 0.0
    %2048 = vmatpush1.msra.mxu0 %v2039
    %2049 = vmatprep.subr.mxu0 0.0
    %2050 = vmatpush1.msra.mxu0 %v2040
    %2051 = vmatprep.subr.mxu0 0.0
    %2052 = vmatpush1.msra.mxu0 0.0
    %2053 = vmatprep.subr.mxu0 0.0
    %2054 = vmatpush1.msra.mxu0 0.0
    %2055 = vmatprep.subr.mxu0 0.0
    %2056 = vmatpush1.msra.mxu0 0.0
    %2057 = vmatprep.subr.mxu0 0.0
    %2058 = vmatpush1.msra.mxu0 0.0
    %2059 = vmatprep.subr.mxu0 0.0
    %2060 = vmatpush1.msra.mxu0 0.0
    %2061 = vmatprep.subr.mxu0 0.0
    %2062 = vmatpush1.msra.mxu0 0.0
    %2063 = vmatprep.subr.mxu0 0.0
    %2064 = vmatpush1.msra.mxu0 0.0
    %2065 = vmatprep.subr.mxu0 0.0
    %2066 = vmatpush1.msra.mxu0 0.0
    %2067 = vmatprep.subr.mxu0 0.0
    %2068 = vmatpush1.msra.mxu0 0.0
    %2069 = vmatprep.subr.mxu0 0.0
    %2070 = vmatpush1.msra.mxu0 0.0
    %2071 = vmatprep.subr.mxu0 0.0
    %2072 = vmatpush1.msra.mxu0 0.0
    %2073 = vmatprep.subr.mxu0 0.0
    %2074 = vmatpush1.msra.mxu0 0.0
    %2075 = vmatprep.subr.mxu0 0.0
    %2076 = vmatpush1.msra.mxu0 0.0
    %2077 = vmatprep.subr.mxu0 0.0
    %2078 = vmatpush1.msra.mxu0 0.0
    %2079 = vmatprep.subr.mxu0 0.0
    %2080 = vmatpush1.msra.mxu0 0.0
    %2081 = vmatprep.subr.mxu0 0.0
    %2082 = vmatpush1.msra.mxu0 0.0
    %2083 = vmatprep.subr.mxu0 0.0
    %2084 = vmatpush1.msra.mxu0 0.0
    %2085 = vmatprep.subr.mxu0 0.0
    %2086 = vmatpush1.msra.mxu0 0.0
    %2087 = vmatprep.subr.mxu0 0.0
    %2088 = vmatpush1.msra.mxu0 0.0
    %2089 = vmatprep.subr.mxu0 0.0
    %2090 = vmatpush1.msra.mxu0 0.0
    %2091 = vmatprep.subr.mxu0 0.0
    %2092 = vmatpush1.msra.mxu0 0.0
    %2093 = vmatprep.subr.mxu0 0.0
    %2094 = vmatpush1.msra.mxu0 0.0
    %2095 = vmatprep.subr.mxu0 0.0
    %2096 = vmatpush1.msra.mxu0 0.0
    %2097 = vmatprep.subr.mxu0 0.0
    %2098 = vmatpush1.msra.mxu0 0.0
    %2099 = vmatprep.subr.mxu0 0.0
    %2100 = vmatpush1.msra.mxu0 0.0
    %2101 = vmatprep.subr.mxu0 0.0
    %2102 = vmatpush1.msra.mxu0 0.0
    %2103 = vmatprep.subr.mxu0 0.0
    %2104 = vmatpush1.msra.mxu0 0.0
    %2105 = vmatprep.subr.mxu0 0.0
    %2106 = vmatpush1.msra.mxu0 0.0
    %2107 = vmatprep.subr.mxu0 0.0
    %2108 = vmatpush1.msra.mxu0 0.0
    %2109 = vmatprep.subr.mxu0 0.0
    %2110 = vmatpush1.msra.mxu0 0.0
    %2111 = vmatprep.mubr.f32.mxu0 0.0
    %2112 = vmatmul.mubr.f32.gmra.mrb[0].mxu0 %v2042
    %v2113 = vpop.f32.mrb[0].mxu0
    %v2114 = vadd.f32 0.0, %v2113
    %v2115 = vpop.f32.mrb[0].mxu0
    %2116 = vmatprep.mubr.f32.mxu0 0.0
    %2117 = vmatmul.mubr.f32.gmra.mrb[0].mxu0 %v2045
    %v2118 = vpop.f32.mrb[0].mxu0
    %v2119 = vadd.f32 0.0, %v2118
    %v2120 = vpop.f32.mrb[0].mxu0
    %2121 = vdwg.mxu0
    %2122 = vmatprep.subr.mxu0 0.0
    %2123 = vmatpush1.msra.mxu0 %v2031
    %2124 = vmatprep.subr.mxu0 0.0
    %2125 = vmatpush1.msra.mxu0 %v2036
    %2126 = vmatprep.subr.mxu0 0.0
    %2127 = vmatpush1.msra.mxu0 0.0
    %2128 = vmatprep.subr.mxu0 0.0
    %2129 = vmatpush1.msra.mxu0 0.0
    %2130 = vmatprep.subr.mxu0 0.0
    %2131 = vmatpush1.msra.mxu0 0.0
    %2132 = vmatprep.subr.mxu0 0.0
    %2133 = vmatpush1.msra.mxu0 0.0
    %2134 = vmatprep.subr.mxu0 0.0
    %2135 = vmatpush1.msra.mxu0 0.0
    %2136 = vmatprep.subr.mxu0 0.0
    %2137 = vmatpush1.msra.mxu0 0.0
    %2138 = vmatprep.subr.mxu0 0.0
    %2139 = vmatpush1.msra.mxu0 0.0
    %2140 = vmatprep.subr.mxu0 0.0
    %2141 = vmatpush1.msra.mxu0 0.0
    %2142 = vmatprep.subr.mxu0 0.0
    %2143 = vmatpush1.msra.mxu0 0.0
    %2144 = vmatprep.subr.mxu0 0.0
    %2145 = vmatpush1.msra.mxu0 0.0
    %2146 = vmatprep.subr.mxu0 0.0
    %2147 = vmatpush1.msra.mxu0 0.0
    %2148 = vmatprep.subr.mxu0 0.0
    %2149 = vmatpush1.msra.mxu0 0.0
    %2150 = vmatprep.subr.mxu0 0.0
    %2151 = vmatpush1.msra.mxu0 0.0
    %2152 = vmatprep.subr.mxu0 0.0
    %2153 = vmatpush1.msra.mxu0 0.0
    %2154 = vmatprep.subr.mxu0 0.0
    %2155 = vmatpush1.msra.mxu0 0.0
    %2156 = vmatprep.subr.mxu0 0.0
    %2157 = vmatpush1.msra.mxu0 0.0
    %2158 = vmatprep.subr.mxu0 0.0
    %2159 = vmatpush1.msra.mxu0 0.0
    %2160 = vmatprep.subr.mxu0 0.0
    %2161 = vmatpush1.msra.mxu0 0.0
    %2162 = vmatprep.subr.mxu0 0.0
    %2163 = vmatpush1.msra.mxu0 0.0
    %2164 = vmatprep.subr.mxu0 0.0
    %2165 = vmatpush1.msra.mxu0 0.0
    %2166 = vmatprep.subr.mxu0 0.0
    %2167 = vmatpush1.msra.mxu0 0.0
    %2168 = vmatprep.subr.mxu0 0.0
    %2169 = vmatpush1.msra.mxu0 0.0
    %2170 = vmatprep.subr.mxu0 0.0
    %2171 = vmatpush1.msra.mxu0 0.0
    %2172 = vmatprep.subr.mxu0 0.0
    %2173 = vmatpush1.msra.mxu0 0.0
    %2174 = vmatprep.subr.mxu0 0.0
    %2175 = vmatpush1.msra.mxu0 0.0
    %2176 = vmatprep.subr.mxu0 0.0
    %2177 = vmatpush1.msra.mxu0 0.0
    %2178 = vmatprep.subr.mxu0 0.0
    %2179 = vmatpush1.msra.mxu0 0.0
    %2180 = vmatprep.subr.mxu0 0.0
    %2181 = vmatpush1.msra.mxu0 0.0
    %2182 = vmatprep.subr.mxu0 0.0
    %2183 = vmatpush1.msra.mxu0 0.0
    %2184 = vmatprep.subr.mxu0 0.0
    %2185 = vmatpush1.msra.mxu0 0.0
    %2186 = vmatprep.mubr.f32.mxu0 0.0
    %2187 = vmatmul.mubr.f32.gmra.mrb[0].mxu0 %v2042
    %v2188 = vpop.f32.mrb[0].mxu0
    %v2189 = vadd.f32 0.0, %v2188
    %v2190 = vpop.f32.mrb[0].mxu0
    %2191 = vmatprep.mubr.f32.mxu0 0.0
    %2192 = vmatmul.mubr.f32.gmra.mrb[0].mxu0 %v2045
    %v2193 = vpop.f32.mrb[0].mxu0
    %v2194 = vadd.f32 0.0, %v2193
    %v2195 = vpop.f32.mrb[0].mxu0
    %2196 = vdwg.mxu0
    %v2197 = vmul.f32 %v2189, 0.0625
    %v2198 = vmul.f32 %v2194, 0.0625
    %v2199 = vmul.f32 %v2197, %v1950
    %v2200 = vmul.f32 %v2198, %v1951
    %v2201 = vsel %vm28, %v2199, 0.0
    %2202 = vadd.xlane.f32.xlu0 %v2201
    %v2203 = vpop.xlane.xlu0 %2202
    %v2204 = vsel %vm28, %v2200, 0.0
    %2205 = vadd.xlane.f32.xlu0 %v2204
    %v2206 = vpop.xlane.xlu0 %2205
    %v2207 = vmul.f32 %v2114, %v2114
    %v2208 = vmul.f32 %v2119, %v2119
    %v2209 = vsub.f32 %v2203, %v2207
    %v2210 = vsub.f32 %v2206, %v2208
    %v2211 = vmax.f32 %v2209, 0.0
    %v2212 = vmax.f32 %v2210, 0.0
    %s2213 = scalar_lea.vmem %s2, 80
    %v2214 = vld [vmem:[%s2213] sm:$0xff]
    %v2215 = vld [vmem:[%s2213 + $0x8] sm:$0xff]
    %v2216 = vadd.f32 %v2211, 1e-05
    %v2217 = vadd.f32 %v2212, 1e-05
    %v2218 = vrsqrt.pop %v2216
    %v2219 = vrsqrt.pop %v2217
    %v2220 = vmul.f32 %v2214, %v2218
    %v2221 = vmul.f32 %v2215, %v2219
    %s2222 = scalar_lea.vmem %s3, 80
    %v2223 = vld [vmem:[%s2222] sm:$0xff]
    %v2224 = vld [vmem:[%s2222 + $0x8] sm:$0xff]
    %v2225 = vmul.f32 %v2114, %v2220
    %v2226 = vmul.f32 %v2119, %v2221
    %v2227 = vsub.f32 %v2223, %v2225
    %v2228 = vsub.f32 %v2224, %v2226
    %2230 = vset.pattern.permute.xlu0 0
    %2231 = vperm.xlu0 %2230, %v2220
    %v2232 = vpop.permute.xlu0 %2231
    %2235 = vset.pattern.permute.xlu0 0
    %2236 = vperm.xlu0 %2235, %v2221
    %v2237 = vpop.permute.xlu0 %2236
    %v2239 = vmul.f32 %v2232, %v1950
    %v2240 = vmul.f32 %v2237, %v1951
    %2242 = vset.pattern.permute.xlu0 0
    %2243 = vperm.xlu0 %2242, %v2227
    %v2244 = vpop.permute.xlu0 %2243
    %2247 = vset.pattern.permute.xlu0 0
    %2248 = vperm.xlu0 %2247, %v2228
    %v2249 = vpop.permute.xlu0 %2248
    %v2252 = vsel %vm28, %v2239, 0
    %v2255 = vsel %vm28, %v2240, 0
    %2257 = vmatprep.subr.mxu0 0.0
    %2258 = vmatpush1.msra.mxu0 %v1947
    %2259 = vmatprep.subr.mxu0 0.0
    %2260 = vmatpush1.msra.mxu0 %v1948
    %2261 = vmatprep.subr.mxu0 0.0
    %2262 = vmatpush1.msra.mxu0 0.0
    %2263 = vmatprep.subr.mxu0 0.0
    %2264 = vmatpush1.msra.mxu0 0.0
    %2265 = vmatprep.subr.mxu0 0.0
    %2266 = vmatpush1.msra.mxu0 0.0
    %2267 = vmatprep.subr.mxu0 0.0
    %2268 = vmatpush1.msra.mxu0 0.0
    %2269 = vmatprep.subr.mxu0 0.0
    %2270 = vmatpush1.msra.mxu0 0.0
    %2271 = vmatprep.subr.mxu0 0.0
    %2272 = vmatpush1.msra.mxu0 0.0
    %2273 = vmatprep.subr.mxu0 0.0
    %2274 = vmatpush1.msra.mxu0 0.0
    %2275 = vmatprep.subr.mxu0 0.0
    %2276 = vmatpush1.msra.mxu0 0.0
    %2277 = vmatprep.subr.mxu0 0.0
    %2278 = vmatpush1.msra.mxu0 0.0
    %2279 = vmatprep.subr.mxu0 0.0
    %2280 = vmatpush1.msra.mxu0 0.0
    %2281 = vmatprep.subr.mxu0 0.0
    %2282 = vmatpush1.msra.mxu0 0.0
    %2283 = vmatprep.subr.mxu0 0.0
    %2284 = vmatpush1.msra.mxu0 0.0
    %2285 = vmatprep.subr.mxu0 0.0
    %2286 = vmatpush1.msra.mxu0 0.0
    %2287 = vmatprep.subr.mxu0 0.0
    %2288 = vmatpush1.msra.mxu0 0.0
    %2289 = vmatprep.subr.mxu0 0.0
    %2290 = vmatpush1.msra.mxu0 0.0
    %2291 = vmatprep.subr.mxu0 0.0
    %2292 = vmatpush1.msra.mxu0 0.0
    %2293 = vmatprep.subr.mxu0 0.0
    %2294 = vmatpush1.msra.mxu0 0.0
    %2295 = vmatprep.subr.mxu0 0.0
    %2296 = vmatpush1.msra.mxu0 0.0
    %2297 = vmatprep.subr.mxu0 0.0
    %2298 = vmatpush1.msra.mxu0 0.0
    %2299 = vmatprep.subr.mxu0 0.0
    %2300 = vmatpush1.msra.mxu0 0.0
    %2301 = vmatprep.subr.mxu0 0.0
    %2302 = vmatpush1.msra.mxu0 0.0
    %2303 = vmatprep.subr.mxu0 0.0
    %2304 = vmatpush1.msra.mxu0 0.0
    %2305 = vmatprep.subr.mxu0 0.0
    %2306 = vmatpush1.msra.mxu0 0.0
    %2307 = vmatprep.subr.mxu0 0.0
    %2308 = vmatpush1.msra.mxu0 0.0
    %2309 = vmatprep.subr.mxu0 0.0
    %2310 = vmatpush1.msra.mxu0 0.0
    %2311 = vmatprep.subr.mxu0 0.0
    %2312 = vmatpush1.msra.mxu0 0.0
    %2313 = vmatprep.subr.mxu0 0.0
    %2314 = vmatpush1.msra.mxu0 0.0
    %2315 = vmatprep.subr.mxu0 0.0
    %2316 = vmatpush1.msra.mxu0 0.0
    %2317 = vmatprep.subr.mxu0 0.0
    %2318 = vmatpush1.msra.mxu0 0.0
    %2319 = vmatprep.subr.mxu0 0.0
    %2320 = vmatpush1.msra.mxu0 0.0
    %2321 = vmatprep.mubr.f32.mxu0 0.0
    %2322 = vmatmul.mubr.f32.gmra.mrb[0].mxu0 %v2252
    %v2323 = vpop.f32.mrb[0].mxu0
    %v2324 = vadd.f32 %v2244, %v2323
    %v2325 = vpop.f32.mrb[0].mxu0
    %2326 = vmatprep.mubr.f32.mxu0 0.0
    %2327 = vmatmul.mubr.f32.gmra.mrb[0].mxu0 %v2255
    %v2328 = vpop.f32.mrb[0].mxu0
    %v2329 = vadd.f32 %v2249, %v2328
    %v2330 = vpop.f32.mrb[0].mxu0
    %2331 = vdwg.mxu0
    %v2332 = vmax.f32 %v2324, 0.0
    %v2333 = vmax.f32 %v2329, 0.0
    %v2334 = vld [vmem:[%s4] sm:$0xff]
    %v2335 = vld [vmem:[%s4 + $0x8] sm:$0xff]
    %v2336 = vld [vmem:[%s5] sm:$0xff]
    %v2337 = vld [vmem:[%s5 + $0x8] sm:$0xff]
    %2339 = vset.pattern.permute.xlu0 0
    %2340 = vperm.xlu0 %2339, %v2336
    %v2341 = vpop.permute.xlu0 %2340
    %2344 = vset.pattern.permute.xlu0 0
    %2345 = vperm.xlu0 %2344, %v2337
    %v2346 = vpop.permute.xlu0 %2345
    %v2349 = vsel %vm28, %v2334, 0
    %v2352 = vsel %vm28, %v2335, 0
    %2354 = vmatprep.subr.mxu0 0.0
    %2355 = vmatpush1.msra.mxu0 %v2332
    %2356 = vmatprep.subr.mxu0 0.0
    %2357 = vmatpush1.msra.mxu0 %v2333
    %2358 = vmatprep.subr.mxu0 0.0
    %2359 = vmatpush1.msra.mxu0 0.0
    %2360 = vmatprep.subr.mxu0 0.0
    %2361 = vmatpush1.msra.mxu0 0.0
    %2362 = vmatprep.subr.mxu0 0.0
    %2363 = vmatpush1.msra.mxu0 0.0
    %2364 = vmatprep.subr.mxu0 0.0
    %2365 = vmatpush1.msra.mxu0 0.0
    %2366 = vmatprep.subr.mxu0 0.0
    %2367 = vmatpush1.msra.mxu0 0.0
    %2368 = vmatprep.subr.mxu0 0.0
    %2369 = vmatpush1.msra.mxu0 0.0
    %2370 = vmatprep.subr.mxu0 0.0
    %2371 = vmatpush1.msra.mxu0 0.0
    %2372 = vmatprep.subr.mxu0 0.0
    %2373 = vmatpush1.msra.mxu0 0.0
    %2374 = vmatprep.subr.mxu0 0.0
    %2375 = vmatpush1.msra.mxu0 0.0
    %2376 = vmatprep.subr.mxu0 0.0
    %2377 = vmatpush1.msra.mxu0 0.0
    %2378 = vmatprep.subr.mxu0 0.0
    %2379 = vmatpush1.msra.mxu0 0.0
    %2380 = vmatprep.subr.mxu0 0.0
    %2381 = vmatpush1.msra.mxu0 0.0
    %2382 = vmatprep.subr.mxu0 0.0
    %2383 = vmatpush1.msra.mxu0 0.0
    %2384 = vmatprep.subr.mxu0 0.0
    %2385 = vmatpush1.msra.mxu0 0.0
    %2386 = vmatprep.subr.mxu0 0.0
    %2387 = vmatpush1.msra.mxu0 0.0
    %2388 = vmatprep.subr.mxu0 0.0
    %2389 = vmatpush1.msra.mxu0 0.0
    %2390 = vmatprep.subr.mxu0 0.0
    %2391 = vmatpush1.msra.mxu0 0.0
    %2392 = vmatprep.subr.mxu0 0.0
    %2393 = vmatpush1.msra.mxu0 0.0
    %2394 = vmatprep.subr.mxu0 0.0
    %2395 = vmatpush1.msra.mxu0 0.0
    %2396 = vmatprep.subr.mxu0 0.0
    %2397 = vmatpush1.msra.mxu0 0.0
    %2398 = vmatprep.subr.mxu0 0.0
    %2399 = vmatpush1.msra.mxu0 0.0
    %2400 = vmatprep.subr.mxu0 0.0
    %2401 = vmatpush1.msra.mxu0 0.0
    %2402 = vmatprep.subr.mxu0 0.0
    %2403 = vmatpush1.msra.mxu0 0.0
    %2404 = vmatprep.subr.mxu0 0.0
    %2405 = vmatpush1.msra.mxu0 0.0
    %2406 = vmatprep.subr.mxu0 0.0
    %2407 = vmatpush1.msra.mxu0 0.0
    %2408 = vmatprep.subr.mxu0 0.0
    %2409 = vmatpush1.msra.mxu0 0.0
    %2410 = vmatprep.subr.mxu0 0.0
    %2411 = vmatpush1.msra.mxu0 0.0
    %2412 = vmatprep.subr.mxu0 0.0
    %2413 = vmatpush1.msra.mxu0 0.0
    %2414 = vmatprep.subr.mxu0 0.0
    %2415 = vmatpush1.msra.mxu0 0.0
    %2416 = vmatprep.subr.mxu0 0.0
    %2417 = vmatpush1.msra.mxu0 0.0
    %2418 = vmatprep.mubr.f32.mxu0 0.0
    %2419 = vmatmul.mubr.f32.gmra.mrb[0].mxu0 %v2349
    %v2420 = vpop.f32.mrb[0].mxu0
    %v2421 = vadd.f32 %v2341, %v2420
    %v2422 = vpop.f32.mrb[0].mxu0
    %2423 = vmatprep.mubr.f32.mxu0 0.0
    %2424 = vmatmul.mubr.f32.gmra.mrb[0].mxu0 %v2352
    %v2425 = vpop.f32.mrb[0].mxu0
    %v2426 = vadd.f32 %v2346, %v2425
    %v2427 = vpop.f32.mrb[0].mxu0
    %2428 = vdwg.mxu0
    %2429 = vst.msk [vmem:[#allocation2] sm:$0xff] %vm28, %v2421
    %2430 = vst.msk [vmem:[#allocation2 + $0x8] sm:$0xff] %vm28, %v2426
    // Predicated region
    $region26: #{tpu_custom_call.1} parent=1 // pred_check
      _
    $region27: #{tpu_custom_call.1} parent=1 // pred_check_branch
      %2432 = sbr.rel (0) target = $region29
    $region28: #{tpu_custom_call.1} parent=1 // pred_region
      %s2434 = ssub.s32 256, 256
      %2435 = vsyncadd [#allocation3], %s2434
      %s2436 = sshll.u32 [#allocation2], 4
      %s2437 = int_to_ptr.vmem [resolvable:$true] %s2436
      %2442 = dma.vmem_to_hbm [thread:$0]  %s2437, 256, %s6, [#allocation3], 128, 128, 8
    $region29: #{tpu_custom_call.1} parent=1 // pred_fallthru
      _
    // Predicated region
    $region30: #{tpu_custom_call.1} parent=1 // pred_check
      _
    $region31: #{tpu_custom_call.1} parent=1 // pred_check_branch
      %2444 = sbr.rel (0) target = $region33
    $region32: #{tpu_custom_call.1} parent=1 // pred_region
      %2445 = dma.done [#allocation3], 256
    $region33: #{tpu_custom_call.1} parent=1 // pred_fallthru
      _
    %2446 = vsyncpa [#allocation3], 1

</llo_original>
